<compile_context>
chip_gen: v7x
topology: tpu7x:2x2x1
jax: 0.10.0
libtpu: 0.0.40
codegen_flags: <defaults>
</compile_context>

<pallas_src>
import functools

import numpy as np
import jax
import jax.numpy as jnp
from jax.experimental import pallas as pl
from jax.experimental.pallas import tpu as pltpu

# ----------------------------- model constants -----------------------------
IN_C = 1
OUT_C = 24
K = 5
STRIDE = 3
IN_HW = 28
OUT_HW = (IN_HW - K) // STRIDE + 1          # 8
FC_IN = OUT_C * OUT_HW * OUT_HW             # 1536
FC_OUT = 10
LEAKY_SLOPE = 0.01                          # nn.LeakyReLU() default

IMG = IN_HW * IN_HW                         # 784 flat pixels per sample
KSPAN = K * IN_HW                           # 140 pixels feeding one output row
GROUP = OUT_C * OUT_HW                      # 192 = (channel, ow) lanes per row

BATCH_TILE = 512                            # samples per grid step (<< VMEM on
                                            # v5e/v6e/v7x with dense layouts)
ROW_CHUNK = 128                             # in-kernel matmul M (vreg pressure)

# Constant selector: G[r, ow, kh*K+kw] = 1 iff r == IN_HW*kh + STRIDE*ow + kw.
# Used (at trace time, outside the kernel) to fold the 5x5 conv weight into
# the (140, 192) per-output-row matmul weight.
_G = np.zeros((KSPAN, OUT_HW, K * K), np.float32)
for _kh in range(K):
    for _kw in range(K):
        for _ow in range(OUT_HW):
            _G[IN_HW * _kh + STRIDE * _ow + _kw, _ow, _kh * K + _kw] = 1.0


def _round_up(a, m):
    return (a + m - 1) // m * m


# ----------------------------- fused Pallas kernel -------------------------
def _make_kernel(n_chunks, rc):
    """Fused conv(5x5,s3) + bias + LeakyReLU + FC(1536->10) on a batch tile."""

    def kernel(x_ref, wc_ref, bc_ref, w2_ref, b2_ref, o_ref):
        # x_ref : (tb, 784)  bf16   streamed, lane-dense image slab
        # wc_ref: (140, 192) bf16   resident folded conv weight
        # bc_ref: (1, 192)   f32    conv bias (per (channel, ow) lane)
        # w2_ref: (8, 192, 10) bf16 resident FC weight (flatten perm folded in)
        # b2_ref: (1, 10)    f32
        # o_ref : (tb, 10)   f32
        for ci in range(n_chunks):                       # static, unrolled
            r0 = ci * rc
            acc = jnp.zeros((rc, FC_OUT), jnp.float32) + b2_ref[...]
            for oh in range(OUT_HW):                     # 8 output rows
                c0 = oh * STRIDE * IN_HW                 # 84 * oh
                sl = x_ref[r0:r0 + rc, c0:c0 + KSPAN]    # (rc, 140) bf16
                a = jnp.dot(sl, wc_ref[...],
                            preferred_element_type=jnp.float32)   # (rc, 192)
                a = a + bc_ref[...]
                a = jnp.where(a >= 0, a, LEAKY_SLOPE * a)          # LeakyReLU
                acc = acc + jnp.dot(a.astype(jnp.bfloat16), w2_ref[oh],
                                    preferred_element_type=jnp.float32)
            o_ref[r0:r0 + rc, :] = acc
    return kernel


# ------------------------------ JAX wrapper --------------------------------
@functools.partial(jax.jit, static_argnames=("batch_tile",))
def pr_cnn_forward(x, conv_w, conv_b, fc_w, fc_b, *, batch_tile=BATCH_TILE):
    """Forward pass matching PR_CNN.forward.

    x:      (B, 1, 28, 28) f32
    conv_w: (24, 1, 5, 5)   torch Conv2d weight layout
    conv_b: (24,)
    fc_w:   (10, 1536)      torch Linear weight layout
    fc_b:   (10,)
    returns (B, 10) f32
    """
    B = x.shape[0]

    # Batch tiling: >=2 grid steps once B >= 256 (both v7x TensorCores busy),
    # 16-row sublane alignment for bf16, 128-row in-kernel chunks.
    if B > 128:
        tb = min(batch_tile, max(128, _round_up(pl.cdiv(B, 2), ROW_CHUNK)))
        rc = ROW_CHUNK
    else:
        tb = _round_up(B, 16)
        rc = tb
    Bp = _round_up(B, tb)
    grid = (Bp // tb,)

    # Lane-dense bf16 image slab; pad batch to the tile.
    img = x.reshape(B, IMG).astype(jnp.bfloat16)
    if Bp != B:
        img = jnp.pad(img, ((0, Bp - B), (0, 0)))

    # Fold the 5x5/stride-3 conv weight into a single (140, 192) matrix shared
    # by all 8 output rows: wc[r, c*8+ow] = conv_w[c,0,kh,kw] at r=28kh+3ow+kw.
    wflat = conv_w.reshape(OUT_C, K * K)
    wc = (jnp.einsum("rwq,cq->rcw", jnp.asarray(_G), wflat)
             .reshape(KSPAN, GROUP).astype(jnp.bfloat16))
    bc = jnp.repeat(conv_b, OUT_HW).reshape(1, GROUP).astype(jnp.float32)

    # Fold PyTorch's NCHW flatten order (c*64 + oh*8 + ow) into the FC weight:
    # w2[oh, c*8+ow, o] = fc_w[o, c*64 + oh*8 + ow].
    w2 = (fc_w.reshape(FC_OUT, OUT_C, OUT_HW, OUT_HW)
              .transpose(2, 1, 3, 0)
              .reshape(OUT_HW, GROUP, FC_OUT)
              .astype(jnp.bfloat16))
    b2 = fc_b.reshape(1, FC_OUT).astype(jnp.float32)

    flops = 2 * Bp * OUT_HW * (KSPAN * GROUP + GROUP * FC_OUT)
    bytes_accessed = (Bp * IMG * 2 + Bp * FC_OUT * 4
                      + (KSPAN * GROUP + OUT_HW * GROUP * FC_OUT) * 2
                      + (GROUP + FC_OUT) * 4)

    out = pl.pallas_call(
        _make_kernel(tb // rc, rc),
        grid=grid,
        in_specs=[
            pl.BlockSpec((tb, IMG), lambda i: (i, 0)),                 # streamed
            pl.BlockSpec((KSPAN, GROUP), lambda i: (0, 0)),            # resident
            pl.BlockSpec((1, GROUP), lambda i: (0, 0)),                # resident
            pl.BlockSpec((OUT_HW, GROUP, FC_OUT), lambda i: (0, 0, 0)),  # resident
            pl.BlockSpec((1, FC_OUT), lambda i: (0, 0)),               # resident
        ],
        out_specs=pl.BlockSpec((tb, FC_OUT), lambda i: (i, 0)),
        out_shape=jax.ShapeDtypeStruct((Bp, FC_OUT), jnp.float32),
        compiler_params=pltpu.CompilerParams(
            dimension_semantics=("parallel",),          # megacore-shard batch
            vmem_limit_bytes=32 * 1024 * 1024),
        cost_estimate=pl.CostEstimate(flops=flops, transcendentals=0,
                                      bytes_accessed=bytes_accessed),
    )(img, wc, bc, w2, b2)

    return out[:B]


# ------------------------- pure-JAX reference check ------------------------
def pr_cnn_reference(x, conv_w, conv_b, fc_w, fc_b):
    y = jax.lax.conv_general_dilated(
        x, conv_w, window_strides=(STRIDE, STRIDE), padding="VALID",
        dimension_numbers=("NCHW", "OIHW", "NCHW"))
    y = y + conv_b.reshape(1, OUT_C, 1, 1)
    y = jnp.where(y >= 0, y, LEAKY_SLOPE * y)
    y = y.reshape(x.shape[0], -1)
    return y @ fc_w.T + fc_b


# --------------------------------- main -------------------------------------
if __name__ == "__main__":
    key = jax.random.PRNGKey(0)
    kx, kw1, kb1, kw2, kb2 = jax.random.split(key, 5)

    # deterministic synthetic parameters (shapes from PR_CNN.__init__)
    conv_w = jax.random.normal(kw1, (OUT_C, IN_C, K, K), dtype=jnp.float32) * 0.1
    conv_b = jax.random.normal(kb1, (OUT_C,), dtype=jnp.float32) * 0.1
    fc_w = jax.random.normal(kw2, (FC_OUT, FC_IN), dtype=jnp.float32) * 0.02
    fc_b = jax.random.normal(kb2, (FC_OUT,), dtype=jnp.float32) * 0.02

    # B=2: tiny single-step case.  B=130: multi-grid-step + batch-padding case.
    for B in (2, 130):
        xb = jax.random.normal(jax.random.fold_in(kx, B),
                               (B, IN_C, IN_HW, IN_HW), dtype=jnp.float32)
        out = jax.block_until_ready(pr_cnn_forward(xb, conv_w, conv_b, fc_w, fc_b))
        ref = jax.block_until_ready(pr_cnn_reference(xb, conv_w, conv_b, fc_w, fc_b))
        assert out.shape == (B, FC_OUT), out.shape
        # bf16 MXU operands with f32 accumulation -> loosened tolerance
        max_err = float(jnp.max(jnp.abs(out - ref)))
        assert jnp.allclose(out, ref, atol=5e-2, rtol=5e-2), (B, max_err)

    print("KERNEL_OK")
</pallas_src>

<mosaic_0001>
module attributes {stable_mosaic.version = 11 : i64} {
  func.func @kernel(%arg0: i32, %arg1: memref<16x784xbf16, #tpu.memory_space<vmem>>, %arg2: memref<140x192xbf16, #tpu.memory_space<vmem>>, %arg3: memref<1x192xf32, #tpu.memory_space<vmem>>, %arg4: memref<8x192x10xbf16, #tpu.memory_space<vmem>>, %arg5: memref<1x10xf32, #tpu.memory_space<vmem>>, %arg6: memref<16x10xf32, #tpu.memory_space<vmem>>) attributes {dimension_semantics = [#tpu.dimension_semantics<parallel>], iteration_bounds = array<i64: 1>, scalar_prefetch = 0 : i64, scratch_operands = 0 : i64, tpu.core_type = #tpu.core_type<tc>, window_params = [{transform_indices = @transform_0, window_bounds = array<i64: 16, 784>}, {pipeline_mode = #tpu.pipeline_mode<synchronous>, transform_indices = @transform_1, window_bounds = array<i64: 140, 192>}, {pipeline_mode = #tpu.pipeline_mode<synchronous>, transform_indices = @transform_2, window_bounds = array<i64: 1, 192>}, {pipeline_mode = #tpu.pipeline_mode<synchronous>, transform_indices = @transform_3, window_bounds = array<i64: 8, 192, 10>}, {pipeline_mode = #tpu.pipeline_mode<synchronous>, transform_indices = @transform_4, window_bounds = array<i64: 1, 10>}, {transform_indices = @transform_5, window_bounds = array<i64: 16, 10>}]} {
    %cst = arith.constant 0.000000e+00 : f32
    %0 = vector.broadcast %cst : f32 to vector<16x10xf32>
    %c0 = arith.constant 0 : index
    %c0_0 = arith.constant 0 : index
    %1 = vector.load %arg5[%c0, %c0_0] : memref<1x10xf32, #tpu.memory_space<vmem>>, vector<1x10xf32>
    %2 = vector.broadcast %1 : vector<1x10xf32> to vector<16x10xf32>
    %3 = arith.addf %0, %2 : vector<16x10xf32>
    %c0_1 = arith.constant 0 : index
    %c0_2 = arith.constant 0 : index
    %4 = vector.load %arg1[%c0_1, %c0_2] : memref<16x784xbf16, #tpu.memory_space<vmem>>, vector<16x140xbf16>
    %c0_3 = arith.constant 0 : index
    %c0_4 = arith.constant 0 : index
    %5 = vector.load %arg2[%c0_3, %c0_4] : memref<140x192xbf16, #tpu.memory_space<vmem>>, vector<140x192xbf16>
    %cst_5 = arith.constant dense<0.000000e+00> : vector<16x192xf32>
    %6 = tpu.matmul %4, %5, %cst_5 {dimension_numbers = #tpu.dot_dimension_numbers<[1], [0], [0], [1], [0, 0, 1, 1], [], []>} : vector<16x140xbf16>, vector<140x192xbf16>, vector<16x192xf32> -> vector<16x192xf32>
    %c0_6 = arith.constant 0 : index
    %c0_7 = arith.constant 0 : index
    %7 = vector.load %arg3[%c0_6, %c0_7] : memref<1x192xf32, #tpu.memory_space<vmem>>, vector<1x192xf32>
    %8 = vector.broadcast %7 : vector<1x192xf32> to vector<16x192xf32>
    %9 = arith.addf %6, %8 : vector<16x192xf32>
    %cst_8 = arith.constant 0.000000e+00 : f32
    %10 = vector.broadcast %cst_8 : f32 to vector<16x192xf32>
    %11 = arith.cmpf oge, %9, %10 : vector<16x192xf32>
    %cst_9 = arith.constant 0.00999999977 : f32
    %12 = vector.broadcast %cst_9 : f32 to vector<16x192xf32>
    %13 = arith.mulf %12, %9 : vector<16x192xf32>
    %14 = arith.select %11, %9, %13 : vector<16x192xi1>, vector<16x192xf32>
    %15 = arith.truncf %14 : vector<16x192xf32> to vector<16x192xbf16>
    %c0_10 = arith.constant 0 : index
    %c0_11 = arith.constant 0 : index
    %c0_12 = arith.constant 0 : index
    %16 = vector.load %arg4[%c0_10, %c0_11, %c0_12] : memref<8x192x10xbf16, #tpu.memory_space<vmem>>, vector<1x192x10xbf16>
    %17 = vector.shape_cast %16 : vector<1x192x10xbf16> to vector<192x10xbf16>
    %cst_13 = arith.constant dense<0.000000e+00> : vector<16x10xf32>
    %18 = tpu.matmul %15, %17, %cst_13 {dimension_numbers = #tpu.dot_dimension_numbers<[1], [0], [0], [1], [0, 0, 1, 1], [], []>} : vector<16x192xbf16>, vector<192x10xbf16>, vector<16x10xf32> -> vector<16x10xf32>
    %19 = arith.addf %3, %18 : vector<16x10xf32>
    %c0_14 = arith.constant 0 : index
    %c84 = arith.constant 84 : index
    %20 = vector.load %arg1[%c0_14, %c84] : memref<16x784xbf16, #tpu.memory_space<vmem>>, vector<16x140xbf16>
    %c0_15 = arith.constant 0 : index
    %c0_16 = arith.constant 0 : index
    %21 = vector.load %arg2[%c0_15, %c0_16] : memref<140x192xbf16, #tpu.memory_space<vmem>>, vector<140x192xbf16>
    %cst_17 = arith.constant dense<0.000000e+00> : vector<16x192xf32>
    %22 = tpu.matmul %20, %21, %cst_17 {dimension_numbers = #tpu.dot_dimension_numbers<[1], [0], [0], [1], [0, 0, 1, 1], [], []>} : vector<16x140xbf16>, vector<140x192xbf16>, vector<16x192xf32> -> vector<16x192xf32>
    %c0_18 = arith.constant 0 : index
    %c0_19 = arith.constant 0 : index
    %23 = vector.load %arg3[%c0_18, %c0_19] : memref<1x192xf32, #tpu.memory_space<vmem>>, vector<1x192xf32>
    %24 = vector.broadcast %23 : vector<1x192xf32> to vector<16x192xf32>
    %25 = arith.addf %22, %24 : vector<16x192xf32>
    %cst_20 = arith.constant 0.000000e+00 : f32
    %26 = vector.broadcast %cst_20 : f32 to vector<16x192xf32>
    %27 = arith.cmpf oge, %25, %26 : vector<16x192xf32>
    %cst_21 = arith.constant 0.00999999977 : f32
    %28 = vector.broadcast %cst_21 : f32 to vector<16x192xf32>
    %29 = arith.mulf %28, %25 : vector<16x192xf32>
    %30 = arith.select %27, %25, %29 : vector<16x192xi1>, vector<16x192xf32>
    %31 = arith.truncf %30 : vector<16x192xf32> to vector<16x192xbf16>
    %c1 = arith.constant 1 : index
    %c0_22 = arith.constant 0 : index
    %c0_23 = arith.constant 0 : index
    %32 = vector.load %arg4[%c1, %c0_22, %c0_23] : memref<8x192x10xbf16, #tpu.memory_space<vmem>>, vector<1x192x10xbf16>
    %33 = vector.shape_cast %32 : vector<1x192x10xbf16> to vector<192x10xbf16>
    %cst_24 = arith.constant dense<0.000000e+00> : vector<16x10xf32>
    %34 = tpu.matmul %31, %33, %cst_24 {dimension_numbers = #tpu.dot_dimension_numbers<[1], [0], [0], [1], [0, 0, 1, 1], [], []>} : vector<16x192xbf16>, vector<192x10xbf16>, vector<16x10xf32> -> vector<16x10xf32>
    %35 = arith.addf %19, %34 : vector<16x10xf32>
    %c0_25 = arith.constant 0 : index
    %c168 = arith.constant 168 : index
    %36 = vector.load %arg1[%c0_25, %c168] : memref<16x784xbf16, #tpu.memory_space<vmem>>, vector<16x140xbf16>
    %c0_26 = arith.constant 0 : index
    %c0_27 = arith.constant 0 : index
    %37 = vector.load %arg2[%c0_26, %c0_27] : memref<140x192xbf16, #tpu.memory_space<vmem>>, vector<140x192xbf16>
    %cst_28 = arith.constant dense<0.000000e+00> : vector<16x192xf32>
    %38 = tpu.matmul %36, %37, %cst_28 {dimension_numbers = #tpu.dot_dimension_numbers<[1], [0], [0], [1], [0, 0, 1, 1], [], []>} : vector<16x140xbf16>, vector<140x192xbf16>, vector<16x192xf32> -> vector<16x192xf32>
    %c0_29 = arith.constant 0 : index
    %c0_30 = arith.constant 0 : index
    %39 = vector.load %arg3[%c0_29, %c0_30] : memref<1x192xf32, #tpu.memory_space<vmem>>, vector<1x192xf32>
    %40 = vector.broadcast %39 : vector<1x192xf32> to vector<16x192xf32>
    %41 = arith.addf %38, %40 : vector<16x192xf32>
    %cst_31 = arith.constant 0.000000e+00 : f32
    %42 = vector.broadcast %cst_31 : f32 to vector<16x192xf32>
    %43 = arith.cmpf oge, %41, %42 : vector<16x192xf32>
    %cst_32 = arith.constant 0.00999999977 : f32
    %44 = vector.broadcast %cst_32 : f32 to vector<16x192xf32>
    %45 = arith.mulf %44, %41 : vector<16x192xf32>
    %46 = arith.select %43, %41, %45 : vector<16x192xi1>, vector<16x192xf32>
    %47 = arith.truncf %46 : vector<16x192xf32> to vector<16x192xbf16>
    %c2 = arith.constant 2 : index
    %c0_33 = arith.constant 0 : index
    %c0_34 = arith.constant 0 : index
    %48 = vector.load %arg4[%c2, %c0_33, %c0_34] : memref<8x192x10xbf16, #tpu.memory_space<vmem>>, vector<1x192x10xbf16>
    %49 = vector.shape_cast %48 : vector<1x192x10xbf16> to vector<192x10xbf16>
    %cst_35 = arith.constant dense<0.000000e+00> : vector<16x10xf32>
    %50 = tpu.matmul %47, %49, %cst_35 {dimension_numbers = #tpu.dot_dimension_numbers<[1], [0], [0], [1], [0, 0, 1, 1], [], []>} : vector<16x192xbf16>, vector<192x10xbf16>, vector<16x10xf32> -> vector<16x10xf32>
    %51 = arith.addf %35, %50 : vector<16x10xf32>
    %c0_36 = arith.constant 0 : index
    %c252 = arith.constant 252 : index
    %52 = vector.load %arg1[%c0_36, %c252] : memref<16x784xbf16, #tpu.memory_space<vmem>>, vector<16x140xbf16>
    %c0_37 = arith.constant 0 : index
    %c0_38 = arith.constant 0 : index
    %53 = vector.load %arg2[%c0_37, %c0_38] : memref<140x192xbf16, #tpu.memory_space<vmem>>, vector<140x192xbf16>
    %cst_39 = arith.constant dense<0.000000e+00> : vector<16x192xf32>
    %54 = tpu.matmul %52, %53, %cst_39 {dimension_numbers = #tpu.dot_dimension_numbers<[1], [0], [0], [1], [0, 0, 1, 1], [], []>} : vector<16x140xbf16>, vector<140x192xbf16>, vector<16x192xf32> -> vector<16x192xf32>
    %c0_40 = arith.constant 0 : index
    %c0_41 = arith.constant 0 : index
    %55 = vector.load %arg3[%c0_40, %c0_41] : memref<1x192xf32, #tpu.memory_space<vmem>>, vector<1x192xf32>
    %56 = vector.broadcast %55 : vector<1x192xf32> to vector<16x192xf32>
    %57 = arith.addf %54, %56 : vector<16x192xf32>
    %cst_42 = arith.constant 0.000000e+00 : f32
    %58 = vector.broadcast %cst_42 : f32 to vector<16x192xf32>
    %59 = arith.cmpf oge, %57, %58 : vector<16x192xf32>
    %cst_43 = arith.constant 0.00999999977 : f32
    %60 = vector.broadcast %cst_43 : f32 to vector<16x192xf32>
    %61 = arith.mulf %60, %57 : vector<16x192xf32>
    %62 = arith.select %59, %57, %61 : vector<16x192xi1>, vector<16x192xf32>
    %63 = arith.truncf %62 : vector<16x192xf32> to vector<16x192xbf16>
    %c3 = arith.constant 3 : index
    %c0_44 = arith.constant 0 : index
    %c0_45 = arith.constant 0 : index
    %64 = vector.load %arg4[%c3, %c0_44, %c0_45] : memref<8x192x10xbf16, #tpu.memory_space<vmem>>, vector<1x192x10xbf16>
    %65 = vector.shape_cast %64 : vector<1x192x10xbf16> to vector<192x10xbf16>
    %cst_46 = arith.constant dense<0.000000e+00> : vector<16x10xf32>
    %66 = tpu.matmul %63, %65, %cst_46 {dimension_numbers = #tpu.dot_dimension_numbers<[1], [0], [0], [1], [0, 0, 1, 1], [], []>} : vector<16x192xbf16>, vector<192x10xbf16>, vector<16x10xf32> -> vector<16x10xf32>
    %67 = arith.addf %51, %66 : vector<16x10xf32>
    %c0_47 = arith.constant 0 : index
    %c336 = arith.constant 336 : index
    %68 = vector.load %arg1[%c0_47, %c336] : memref<16x784xbf16, #tpu.memory_space<vmem>>, vector<16x140xbf16>
    %c0_48 = arith.constant 0 : index
    %c0_49 = arith.constant 0 : index
    %69 = vector.load %arg2[%c0_48, %c0_49] : memref<140x192xbf16, #tpu.memory_space<vmem>>, vector<140x192xbf16>
    %cst_50 = arith.constant dense<0.000000e+00> : vector<16x192xf32>
    %70 = tpu.matmul %68, %69, %cst_50 {dimension_numbers = #tpu.dot_dimension_numbers<[1], [0], [0], [1], [0, 0, 1, 1], [], []>} : vector<16x140xbf16>, vector<140x192xbf16>, vector<16x192xf32> -> vector<16x192xf32>
    %c0_51 = arith.constant 0 : index
    %c0_52 = arith.constant 0 : index
    %71 = vector.load %arg3[%c0_51, %c0_52] : memref<1x192xf32, #tpu.memory_space<vmem>>, vector<1x192xf32>
    %72 = vector.broadcast %71 : vector<1x192xf32> to vector<16x192xf32>
    %73 = arith.addf %70, %72 : vector<16x192xf32>
    %cst_53 = arith.constant 0.000000e+00 : f32
    %74 = vector.broadcast %cst_53 : f32 to vector<16x192xf32>
    %75 = arith.cmpf oge, %73, %74 : vector<16x192xf32>
    %cst_54 = arith.constant 0.00999999977 : f32
    %76 = vector.broadcast %cst_54 : f32 to vector<16x192xf32>
    %77 = arith.mulf %76, %73 : vector<16x192xf32>
    %78 = arith.select %75, %73, %77 : vector<16x192xi1>, vector<16x192xf32>
    %79 = arith.truncf %78 : vector<16x192xf32> to vector<16x192xbf16>
    %c4 = arith.constant 4 : index
    %c0_55 = arith.constant 0 : index
    %c0_56 = arith.constant 0 : index
    %80 = vector.load %arg4[%c4, %c0_55, %c0_56] : memref<8x192x10xbf16, #tpu.memory_space<vmem>>, vector<1x192x10xbf16>
    %81 = vector.shape_cast %80 : vector<1x192x10xbf16> to vector<192x10xbf16>
    %cst_57 = arith.constant dense<0.000000e+00> : vector<16x10xf32>
    %82 = tpu.matmul %79, %81, %cst_57 {dimension_numbers = #tpu.dot_dimension_numbers<[1], [0], [0], [1], [0, 0, 1, 1], [], []>} : vector<16x192xbf16>, vector<192x10xbf16>, vector<16x10xf32> -> vector<16x10xf32>
    %83 = arith.addf %67, %82 : vector<16x10xf32>
    %c0_58 = arith.constant 0 : index
    %c420 = arith.constant 420 : index
    %84 = vector.load %arg1[%c0_58, %c420] : memref<16x784xbf16, #tpu.memory_space<vmem>>, vector<16x140xbf16>
    %c0_59 = arith.constant 0 : index
    %c0_60 = arith.constant 0 : index
    %85 = vector.load %arg2[%c0_59, %c0_60] : memref<140x192xbf16, #tpu.memory_space<vmem>>, vector<140x192xbf16>
    %cst_61 = arith.constant dense<0.000000e+00> : vector<16x192xf32>
    %86 = tpu.matmul %84, %85, %cst_61 {dimension_numbers = #tpu.dot_dimension_numbers<[1], [0], [0], [1], [0, 0, 1, 1], [], []>} : vector<16x140xbf16>, vector<140x192xbf16>, vector<16x192xf32> -> vector<16x192xf32>
    %c0_62 = arith.constant 0 : index
    %c0_63 = arith.constant 0 : index
    %87 = vector.load %arg3[%c0_62, %c0_63] : memref<1x192xf32, #tpu.memory_space<vmem>>, vector<1x192xf32>
    %88 = vector.broadcast %87 : vector<1x192xf32> to vector<16x192xf32>
    %89 = arith.addf %86, %88 : vector<16x192xf32>
    %cst_64 = arith.constant 0.000000e+00 : f32
    %90 = vector.broadcast %cst_64 : f32 to vector<16x192xf32>
    %91 = arith.cmpf oge, %89, %90 : vector<16x192xf32>
    %cst_65 = arith.constant 0.00999999977 : f32
    %92 = vector.broadcast %cst_65 : f32 to vector<16x192xf32>
    %93 = arith.mulf %92, %89 : vector<16x192xf32>
    %94 = arith.select %91, %89, %93 : vector<16x192xi1>, vector<16x192xf32>
    %95 = arith.truncf %94 : vector<16x192xf32> to vector<16x192xbf16>
    %c5 = arith.constant 5 : index
    %c0_66 = arith.constant 0 : index
    %c0_67 = arith.constant 0 : index
    %96 = vector.load %arg4[%c5, %c0_66, %c0_67] : memref<8x192x10xbf16, #tpu.memory_space<vmem>>, vector<1x192x10xbf16>
    %97 = vector.shape_cast %96 : vector<1x192x10xbf16> to vector<192x10xbf16>
    %cst_68 = arith.constant dense<0.000000e+00> : vector<16x10xf32>
    %98 = tpu.matmul %95, %97, %cst_68 {dimension_numbers = #tpu.dot_dimension_numbers<[1], [0], [0], [1], [0, 0, 1, 1], [], []>} : vector<16x192xbf16>, vector<192x10xbf16>, vector<16x10xf32> -> vector<16x10xf32>
    %99 = arith.addf %83, %98 : vector<16x10xf32>
    %c0_69 = arith.constant 0 : index
    %c504 = arith.constant 504 : index
    %100 = vector.load %arg1[%c0_69, %c504] : memref<16x784xbf16, #tpu.memory_space<vmem>>, vector<16x140xbf16>
    %c0_70 = arith.constant 0 : index
    %c0_71 = arith.constant 0 : index
    %101 = vector.load %arg2[%c0_70, %c0_71] : memref<140x192xbf16, #tpu.memory_space<vmem>>, vector<140x192xbf16>
    %cst_72 = arith.constant dense<0.000000e+00> : vector<16x192xf32>
    %102 = tpu.matmul %100, %101, %cst_72 {dimension_numbers = #tpu.dot_dimension_numbers<[1], [0], [0], [1], [0, 0, 1, 1], [], []>} : vector<16x140xbf16>, vector<140x192xbf16>, vector<16x192xf32> -> vector<16x192xf32>
    %c0_73 = arith.constant 0 : index
    %c0_74 = arith.constant 0 : index
    %103 = vector.load %arg3[%c0_73, %c0_74] : memref<1x192xf32, #tpu.memory_space<vmem>>, vector<1x192xf32>
    %104 = vector.broadcast %103 : vector<1x192xf32> to vector<16x192xf32>
    %105 = arith.addf %102, %104 : vector<16x192xf32>
    %cst_75 = arith.constant 0.000000e+00 : f32
    %106 = vector.broadcast %cst_75 : f32 to vector<16x192xf32>
    %107 = arith.cmpf oge, %105, %106 : vector<16x192xf32>
    %cst_76 = arith.constant 0.00999999977 : f32
    %108 = vector.broadcast %cst_76 : f32 to vector<16x192xf32>
    %109 = arith.mulf %108, %105 : vector<16x192xf32>
    %110 = arith.select %107, %105, %109 : vector<16x192xi1>, vector<16x192xf32>
    %111 = arith.truncf %110 : vector<16x192xf32> to vector<16x192xbf16>
    %c6 = arith.constant 6 : index
    %c0_77 = arith.constant 0 : index
    %c0_78 = arith.constant 0 : index
    %112 = vector.load %arg4[%c6, %c0_77, %c0_78] : memref<8x192x10xbf16, #tpu.memory_space<vmem>>, vector<1x192x10xbf16>
    %113 = vector.shape_cast %112 : vector<1x192x10xbf16> to vector<192x10xbf16>
    %cst_79 = arith.constant dense<0.000000e+00> : vector<16x10xf32>
    %114 = tpu.matmul %111, %113, %cst_79 {dimension_numbers = #tpu.dot_dimension_numbers<[1], [0], [0], [1], [0, 0, 1, 1], [], []>} : vector<16x192xbf16>, vector<192x10xbf16>, vector<16x10xf32> -> vector<16x10xf32>
    %115 = arith.addf %99, %114 : vector<16x10xf32>
    %c0_80 = arith.constant 0 : index
    %c588 = arith.constant 588 : index
    %116 = vector.load %arg1[%c0_80, %c588] : memref<16x784xbf16, #tpu.memory_space<vmem>>, vector<16x140xbf16>
    %c0_81 = arith.constant 0 : index
    %c0_82 = arith.constant 0 : index
    %117 = vector.load %arg2[%c0_81, %c0_82] : memref<140x192xbf16, #tpu.memory_space<vmem>>, vector<140x192xbf16>
    %cst_83 = arith.constant dense<0.000000e+00> : vector<16x192xf32>
    %118 = tpu.matmul %116, %117, %cst_83 {dimension_numbers = #tpu.dot_dimension_numbers<[1], [0], [0], [1], [0, 0, 1, 1], [], []>} : vector<16x140xbf16>, vector<140x192xbf16>, vector<16x192xf32> -> vector<16x192xf32>
    %c0_84 = arith.constant 0 : index
    %c0_85 = arith.constant 0 : index
    %119 = vector.load %arg3[%c0_84, %c0_85] : memref<1x192xf32, #tpu.memory_space<vmem>>, vector<1x192xf32>
    %120 = vector.broadcast %119 : vector<1x192xf32> to vector<16x192xf32>
    %121 = arith.addf %118, %120 : vector<16x192xf32>
    %cst_86 = arith.constant 0.000000e+00 : f32
    %122 = vector.broadcast %cst_86 : f32 to vector<16x192xf32>
    %123 = arith.cmpf oge, %121, %122 : vector<16x192xf32>
    %cst_87 = arith.constant 0.00999999977 : f32
    %124 = vector.broadcast %cst_87 : f32 to vector<16x192xf32>
    %125 = arith.mulf %124, %121 : vector<16x192xf32>
    %126 = arith.select %123, %121, %125 : vector<16x192xi1>, vector<16x192xf32>
    %127 = arith.truncf %126 : vector<16x192xf32> to vector<16x192xbf16>
    %c7 = arith.constant 7 : index
    %c0_88 = arith.constant 0 : index
    %c0_89 = arith.constant 0 : index
    %128 = vector.load %arg4[%c7, %c0_88, %c0_89] : memref<8x192x10xbf16, #tpu.memory_space<vmem>>, vector<1x192x10xbf16>
    %129 = vector.shape_cast %128 : vector<1x192x10xbf16> to vector<192x10xbf16>
    %cst_90 = arith.constant dense<0.000000e+00> : vector<16x10xf32>
    %130 = tpu.matmul %127, %129, %cst_90 {dimension_numbers = #tpu.dot_dimension_numbers<[1], [0], [0], [1], [0, 0, 1, 1], [], []>} : vector<16x192xbf16>, vector<192x10xbf16>, vector<16x10xf32> -> vector<16x10xf32>
    %131 = arith.addf %115, %130 : vector<16x10xf32>
    %c0_91 = arith.constant 0 : index
    %c0_92 = arith.constant 0 : index
    %132 = vector.load %arg6[%c0_91, %c0_92] : memref<16x10xf32, #tpu.memory_space<vmem>>, vector<16x10xf32>
    tpu.vector_store %arg6[%c0_91, %c0_92], %131 {strides = array<i32>} : memref<16x10xf32, #tpu.memory_space<vmem>>, vector<16x10xf32>,
    return
  }
  func.func @transform_0(%arg0: i32) -> (i32, i32) {
    %c0_i32 = arith.constant 0 : i32
    %c0_i32_0 = arith.constant 0 : i32
    return %arg0, %c0_i32 : i32, i32
  }
  func.func @transform_1(%arg0: i32) -> (i32, i32) {
    %c0_i32 = arith.constant 0 : i32
    %c0_i32_0 = arith.constant 0 : i32
    %c0_i32_1 = arith.constant 0 : i32
    return %c0_i32, %c0_i32_0 : i32, i32
  }
  func.func @transform_2(%arg0: i32) -> (i32, i32) {
    %c0_i32 = arith.constant 0 : i32
    %c0_i32_0 = arith.constant 0 : i32
    %c0_i32_1 = arith.constant 0 : i32
    return %c0_i32, %c0_i32_0 : i32, i32
  }
  func.func @transform_3(%arg0: i32) -> (i32, i32, i32) {
    %c0_i32 = arith.constant 0 : i32
    %c0_i32_0 = arith.constant 0 : i32
    %c0_i32_1 = arith.constant 0 : i32
    %c0_i32_2 = arith.constant 0 : i32
    return %c0_i32, %c0_i32_0, %c0_i32_1 : i32, i32, i32
  }
  func.func @transform_4(%arg0: i32) -> (i32, i32) {
    %c0_i32 = arith.constant 0 : i32
    %c0_i32_0 = arith.constant 0 : i32
    %c0_i32_1 = arith.constant 0 : i32
    return %c0_i32, %c0_i32_0 : i32, i32
  }
  func.func @transform_5(%arg0: i32) -> (i32, i32) {
    %c0_i32 = arith.constant 0 : i32
    %c0_i32_0 = arith.constant 0 : i32
    return %arg0, %c0_i32 : i32, i32
  }
}

</mosaic_0001>

<llo_original>
// kernel: pr_cnn_forward.1
$region0: #{pr_cnn_forward.1}
  #allocation0 [shape = 'u32[]', space=smem, size = 0x4, offset = 0x4, fixed_abs, tag = 'smem constant byte address 0x4 - core index']
  #allocation1 [shape = 'u32[144,128]{1,0:T(1,128)}', space=vmem, size = 0x12000, scoped, tag = 'internal scratch']
  %s0 = inlined_call_operand.vmem [shape: bf16[16,784], index: 0, kind: input, shape index: {}]
  %s1 = inlined_call_operand.vmem [shape: bf16[140,192], index: 1, kind: input, shape index: {}]
  %s2 = inlined_call_operand.vmem [shape: f32[1,192], index: 2, kind: input, shape index: {}]
  %s3 = inlined_call_operand.vmem [shape: bf16[8,192,10], index: 3, kind: input, shape index: {}]
  %s4 = inlined_call_operand.vmem [shape: f32[1,10], index: 4, kind: input, shape index: {}]
  %s5 = inlined_call_operand.vmem [shape: f32[16,10], index: 5, kind: output, shape index: {}]
  %s6 = sld [smem:[#allocation0]]
  $region30: #{pr_cnn_forward.1} parent=0
    _
  %s8 = ssub.s32 1, %s6
  %s9 = scalar_select 0, %s8, %s6
  // Predicated region
  $region2: #{pr_cnn_forward.1} parent=0 // pred_check
    _
  $region3: #{pr_cnn_forward.1} parent=0 // pred_check_branch
    %11 = sbr.rel (0) target = $region5
  $region4: #{pr_cnn_forward.1} parent=0 // pred_region
    _
  $region5: #{pr_cnn_forward.1} parent=0 // pred_fallthru
    _
  // Predicated region
  $region6: #{pr_cnn_forward.1} parent=0 // pred_check
    _
  $region7: #{pr_cnn_forward.1} parent=0 // pred_check_branch
    %13 = sbr.rel (0) target = $region9
  $region8: #{pr_cnn_forward.1} parent=0 // pred_region
    _
  $region9: #{pr_cnn_forward.1} parent=0 // pred_fallthru
    _
  // Predicated region
  $region10: #{pr_cnn_forward.1} parent=0 // pred_check
    _
  $region11: #{pr_cnn_forward.1} parent=0 // pred_check_branch
    %15 = sbr.rel (0) target = $region13
  $region12: #{pr_cnn_forward.1} parent=0 // pred_region
    _
  $region13: #{pr_cnn_forward.1} parent=0 // pred_fallthru
    _
  // Predicated region
  $region14: #{pr_cnn_forward.1} parent=0 // pred_check
    _
  $region15: #{pr_cnn_forward.1} parent=0 // pred_check_branch
    %17 = sbr.rel (0) target = $region17
  $region16: #{pr_cnn_forward.1} parent=0 // pred_region
    _
  $region17: #{pr_cnn_forward.1} parent=0 // pred_fallthru
    _
  // Predicated region
  $region18: #{pr_cnn_forward.1} parent=0 // pred_check
    _
  $region19: #{pr_cnn_forward.1} parent=0 // pred_check_branch
    %19 = sbr.rel (0) target = $region21
  $region20: #{pr_cnn_forward.1} parent=0 // pred_region
    _
  $region21: #{pr_cnn_forward.1} parent=0 // pred_fallthru
    _
  %v21 = vld [vmem:[%s4] sm:$0x1]
  %v23 = vlaneseq
  %v24 = vshrl.u32 %v23, 7
  %v25 = vsub.s32 0, %v24
  %v26 = vrot.slane %v21, %v25
  %v28 = vadd.f32 %v26, 0.0
  %v29 = vld [vmem:[%s0] sm:$0xff]
  %v30 = vld [vmem:[%s0 + $0x1c] sm:$0xff]
  %v31 = vld [vmem:[%s1] sm:$0xff]
  %v32 = vld [vmem:[%s1 + $0x8] sm:$0xff]
  %v33 = vld [vmem:[%s1 + $0x10] sm:$0xff]
  %v34 = vld [vmem:[%s1 + $0x18] sm:$0xff]
  %v35 = vld [vmem:[%s1 + $0x20] sm:$0xff]
  %v36 = vld [vmem:[%s1 + $0x28] sm:$0xff]
  %v37 = vld [vmem:[%s1 + $0x30] sm:$0xff]
  %v38 = vld [vmem:[%s1 + $0x38] sm:$0xff]
  %v39 = vld [vmem:[%s1 + $0x40] sm:$0xff]
  %v40 = vld [vmem:[%s1 + $0x48] sm:$0xff]
  %v41 = vld [vmem:[%s1 + $0x50] sm:$0xff]
  %v42 = vld [vmem:[%s1 + $0x58] sm:$0xff]
  %v43 = vld [vmem:[%s1 + $0x60] sm:$0xff]
  %v44 = vld [vmem:[%s1 + $0x68] sm:$0xff]
  %v45 = vld [vmem:[%s1 + $0x70] sm:$0xff]
  %v46 = vld [vmem:[%s1 + $0x78] sm:$0xff]
  %v47 = vld [vmem:[%s1 + $0x80] sm:$0xff]
  %v48 = vld [vmem:[%s1 + $0x88] sm:$0x33]
  %v49 = vld [vmem:[%s2] sm:$0x3]
  %v51 = vlaneseq
  %v52 = vshrl.u32 %v51, 7
  %v53 = vsub.s32 0, %v52
  %v54 = vrot.slane %v49, %v53
  %v55 = vlaneseq
  %v56 = vshrl.u32 %v55, 7
  %v57 = vsub.s32 1, %v56
  %v58 = vrot.slane %v49, %v57
  %v63 = vunpack.c.l.b16 %v29
  %v64 = vunpack.c.h.b16 %v29
  %v65 = vunpack.c.l.b16 %v30
  %v66 = vunpack.c.h.b16 %v30
  %v67 = vpack.c.b16 %v65, %v63
  %v68 = vpack.c.b16 %v66, %v64
  %v88 = vunpack.c.l.b16 %v31
  %v89 = vunpack.c.h.b16 %v31
  %v90 = vunpack.c.l.b16 %v32
  %v91 = vunpack.c.h.b16 %v32
  %v92 = vunpack.c.l.b16 %v33
  %v93 = vunpack.c.h.b16 %v33
  %v94 = vunpack.c.l.b16 %v34
  %v95 = vunpack.c.h.b16 %v34
  %v96 = vunpack.c.l.b16 %v35
  %v97 = vunpack.c.h.b16 %v35
  %v98 = vunpack.c.l.b16 %v36
  %v99 = vunpack.c.h.b16 %v36
  %v100 = vunpack.c.l.b16 %v37
  %v101 = vunpack.c.h.b16 %v37
  %v102 = vunpack.c.l.b16 %v38
  %v103 = vunpack.c.h.b16 %v38
  %v104 = vunpack.c.l.b16 %v39
  %v105 = vunpack.c.h.b16 %v39
  %v106 = vunpack.c.l.b16 %v40
  %v107 = vunpack.c.h.b16 %v40
  %v108 = vunpack.c.l.b16 %v41
  %v109 = vunpack.c.h.b16 %v41
  %v110 = vunpack.c.l.b16 %v42
  %v111 = vunpack.c.h.b16 %v42
  %v112 = vunpack.c.l.b16 %v43
  %v113 = vunpack.c.h.b16 %v43
  %v114 = vunpack.c.l.b16 %v44
  %v115 = vunpack.c.h.b16 %v44
  %v116 = vunpack.c.l.b16 %v45
  %v117 = vunpack.c.h.b16 %v45
  %v118 = vunpack.c.l.b16 %v46
  %v119 = vunpack.c.h.b16 %v46
  %v120 = vunpack.c.l.b16 %v47
  %v121 = vunpack.c.h.b16 %v47
  %v122 = vunpack.c.l.b16 %v48
  %v123 = vunpack.c.h.b16 %v48
  %v124 = vpack.c.b16 %v90, %v88
  %v125 = vpack.c.b16 %v91, %v89
  %v126 = vpack.c.b16 %v94, %v92
  %v127 = vpack.c.b16 %v95, %v93
  %v128 = vpack.c.b16 %v98, %v96
  %v129 = vpack.c.b16 %v99, %v97
  %v130 = vpack.c.b16 %v102, %v100
  %v131 = vpack.c.b16 %v103, %v101
  %v132 = vpack.c.b16 %v106, %v104
  %v133 = vpack.c.b16 %v107, %v105
  %v134 = vpack.c.b16 %v110, %v108
  %v135 = vpack.c.b16 %v111, %v109
  %v136 = vpack.c.b16 %v114, %v112
  %v137 = vpack.c.b16 %v115, %v113
  %v138 = vpack.c.b16 %v118, %v116
  %v139 = vpack.c.b16 %v119, %v117
  %v140 = vpack.c.b16 %v122, %v120
  %v141 = vpack.c.b16 %v123, %v121
  %vm158 = vcmask 97280
  %v160 = vsel %vm158, %v68, 0
  %vm162 = vcmask 1045504
  %v164 = vsel %vm162, %v140, 0
  %v167 = vsel %vm162, %v141, 0
  %169 = vmatprep.subr.bf16.mxu0 %v125
  %170 = vmatpush1.bf16.msra.mxu0 %v124
  %171 = vmatprep.subr.bf16.mxu0 %v127
  %172 = vmatpush1.bf16.msra.mxu0 %v126
  %173 = vmatprep.subr.bf16.mxu0 %v129
  %174 = vmatpush1.bf16.msra.mxu0 %v128
  %175 = vmatprep.subr.bf16.mxu0 %v131
  %176 = vmatpush1.bf16.msra.mxu0 %v130
  %177 = vmatprep.subr.bf16.mxu0 %v133
  %178 = vmatpush1.bf16.msra.mxu0 %v132
  %179 = vmatprep.subr.bf16.mxu0 %v135
  %180 = vmatpush1.bf16.msra.mxu0 %v134
  %181 = vmatprep.subr.bf16.mxu0 %v137
  %182 = vmatpush1.bf16.msra.mxu0 %v136
  %183 = vmatprep.subr.bf16.mxu0 %v139
  %184 = vmatpush1.bf16.msra.mxu0 %v138
  %185 = vmatprep.subr.bf16.mxu0 %v167
  %186 = vmatpush1.bf16.msra.mxu0 %v164
  %187 = vmatprep.subr.bf16.mxu0 0
  %188 = vmatpush1.bf16.msra.mxu0 0
  %189 = vmatprep.subr.bf16.mxu0 0
  %190 = vmatpush1.bf16.msra.mxu0 0
  %191 = vmatprep.subr.bf16.mxu0 0
  %192 = vmatpush1.bf16.msra.mxu0 0
  %193 = vmatprep.subr.bf16.mxu0 0
  %194 = vmatpush1.bf16.msra.mxu0 0
  %195 = vmatprep.subr.bf16.mxu0 0
  %196 = vmatpush1.bf16.msra.mxu0 0
  %197 = vmatprep.subr.bf16.mxu0 0
  %198 = vmatpush1.bf16.msra.mxu0 0
  %199 = vmatprep.subr.bf16.mxu0 0
  %200 = vmatpush1.bf16.msra.mxu0 0
  %201 = vmatprep.mubr.bf16.mxu0 %v160
  %202 = vmatmul.mubr.bf16.gmra.mrb[0].mxu0 %v67
  %v203 = vpop.f32.mrb[0].mxu0
  %v204 = vadd.f32 %v54, %v203
  %v205 = vpop.f32.mrb[0].mxu0
  %v206 = vadd.f32 %v58, %v205
  %v207 = vpop.f32.mrb[0].mxu0
  %v208 = vadd.f32 %v54, %v207
  %v209 = vpop.f32.mrb[0].mxu0
  %v210 = vadd.f32 %v58, %v209
  %211 = vdwg.mxu0
  %vm212 = vcmp.ge.f32.partialorder %v204, 0.0
  %vm213 = vcmp.ge.f32.partialorder %v206, 0.0
  %vm214 = vcmp.ge.f32.partialorder %v208, 0.0
  %vm215 = vcmp.ge.f32.partialorder %v210, 0.0
  %v216 = vmul.f32 %v204, 0.01
  %v217 = vmul.f32 %v206, 0.01
  %v218 = vmul.f32 %v208, 0.01
  %v219 = vmul.f32 %v210, 0.01
  %v220 = vsel %vm212, %v204, %v216
  %v221 = vsel %vm213, %v206, %v217
  %v222 = vsel %vm214, %v208, %v218
  %v223 = vsel %vm215, %v210, %v219
  %v224 = vpack.c.bf16 %v222, %v220
  %v225 = vpack.c.bf16 %v223, %v221
  %v226 = vld [vmem:[%s3] sm:$0xf]
  %v227 = vld [vmem:[%s3 + $0x4] sm:$0xf]
  %v228 = vld [vmem:[%s3 + $0x8] sm:$0xf]
  %v229 = vld [vmem:[%s3 + $0xc] sm:$0xf]
  %v230 = vld [vmem:[%s3 + $0x10] sm:$0xf]
  %v231 = vld [vmem:[%s3 + $0x14] sm:$0xf]
  %v232 = vld [vmem:[%s3 + $0x18] sm:$0xf]
  %v233 = vld [vmem:[%s3 + $0x1c] sm:$0xf]
  %v234 = vld [vmem:[%s3 + $0x20] sm:$0xf]
  %v235 = vld [vmem:[%s3 + $0x24] sm:$0xf]
  %v236 = vld [vmem:[%s3 + $0x28] sm:$0xf]
  %v237 = vld [vmem:[%s3 + $0x2c] sm:$0xf]
  %v238 = vld [vmem:[%s3 + $0x30] sm:$0xf]
  %v239 = vld [vmem:[%s3 + $0x34] sm:$0xf]
  %v240 = vld [vmem:[%s3 + $0x38] sm:$0xf]
  %v241 = vld [vmem:[%s3 + $0x3c] sm:$0xf]
  %v242 = vld [vmem:[%s3 + $0x40] sm:$0xf]
  %v243 = vld [vmem:[%s3 + $0x44] sm:$0xf]
  %v244 = vld [vmem:[%s3 + $0x48] sm:$0xf]
  %v245 = vld [vmem:[%s3 + $0x4c] sm:$0xf]
  %v246 = vld [vmem:[%s3 + $0x50] sm:$0xf]
  %v247 = vld [vmem:[%s3 + $0x54] sm:$0xf]
  %v248 = vld [vmem:[%s3 + $0x58] sm:$0xf]
  %v249 = vld [vmem:[%s3 + $0x5c] sm:$0xf]
  %v274 = vunpack.c.l.b16 %v226
  %v275 = vunpack.c.l.b16 %v227
  %v276 = vunpack.c.l.b16 %v228
  %v277 = vunpack.c.l.b16 %v229
  %v278 = vunpack.c.l.b16 %v230
  %v279 = vunpack.c.l.b16 %v231
  %v280 = vunpack.c.l.b16 %v232
  %v281 = vunpack.c.l.b16 %v233
  %v282 = vunpack.c.l.b16 %v234
  %v283 = vunpack.c.l.b16 %v235
  %v284 = vunpack.c.l.b16 %v236
  %v285 = vunpack.c.l.b16 %v237
  %v286 = vunpack.c.l.b16 %v238
  %v287 = vunpack.c.l.b16 %v239
  %v288 = vunpack.c.l.b16 %v240
  %v289 = vunpack.c.l.b16 %v241
  %v290 = vunpack.c.l.b16 %v242
  %v291 = vunpack.c.l.b16 %v243
  %v292 = vunpack.c.l.b16 %v244
  %v293 = vunpack.c.l.b16 %v245
  %v294 = vunpack.c.l.b16 %v246
  %v295 = vunpack.c.l.b16 %v247
  %v296 = vunpack.c.l.b16 %v248
  %v297 = vunpack.c.l.b16 %v249
  %v298 = vpack.c.b16 %v275, %v274
  %v299 = vpack.c.b16 %v277, %v276
  %v300 = vpack.c.b16 %v279, %v278
  %v301 = vpack.c.b16 %v281, %v280
  %v302 = vpack.c.b16 %v283, %v282
  %v303 = vpack.c.b16 %v285, %v284
  %v304 = vpack.c.b16 %v287, %v286
  %v305 = vpack.c.b16 %v289, %v288
  %v306 = vpack.c.b16 %v291, %v290
  %v307 = vpack.c.b16 %v293, %v292
  %v308 = vpack.c.b16 %v295, %v294
  %v309 = vpack.c.b16 %v297, %v296
  %vm322 = vcmask 523264
  %v324 = vsel %vm322, %v225, 0
  %326 = vmatprep.subr.bf16.mxu0 0
  %327 = vmatpush1.bf16.msra.mxu0 %v298
  %328 = vmatprep.subr.bf16.mxu0 0
  %329 = vmatpush1.bf16.msra.mxu0 %v299
  %330 = vmatprep.subr.bf16.mxu0 0
  %331 = vmatpush1.bf16.msra.mxu0 %v300
  %332 = vmatprep.subr.bf16.mxu0 0
  %333 = vmatpush1.bf16.msra.mxu0 %v301
  %334 = vmatprep.subr.bf16.mxu0 0
  %335 = vmatpush1.bf16.msra.mxu0 %v302
  %336 = vmatprep.subr.bf16.mxu0 0
  %337 = vmatpush1.bf16.msra.mxu0 %v303
  %338 = vmatprep.subr.bf16.mxu0 0
  %339 = vmatpush1.bf16.msra.mxu0 %v304
  %340 = vmatprep.subr.bf16.mxu0 0
  %341 = vmatpush1.bf16.msra.mxu0 %v305
  %342 = vmatprep.subr.bf16.mxu0 0
  %343 = vmatpush1.bf16.msra.mxu0 %v306
  %344 = vmatprep.subr.bf16.mxu0 0
  %345 = vmatpush1.bf16.msra.mxu0 %v307
  %346 = vmatprep.subr.bf16.mxu0 0
  %347 = vmatpush1.bf16.msra.mxu0 %v308
  %348 = vmatprep.subr.bf16.mxu0 0
  %349 = vmatpush1.bf16.msra.mxu0 %v309
  %350 = vmatprep.subr.bf16.mxu0 0
  %351 = vmatpush1.bf16.msra.mxu0 0
  %352 = vmatprep.subr.bf16.mxu0 0
  %353 = vmatpush1.bf16.msra.mxu0 0
  %354 = vmatprep.subr.bf16.mxu0 0
  %355 = vmatpush1.bf16.msra.mxu0 0
  %356 = vmatprep.subr.bf16.mxu0 0
  %357 = vmatpush1.bf16.msra.mxu0 0
  %358 = vmatprep.mubr.bf16.mxu0 %v324
  %359 = vmatmul.mubr.bf16.gmra.mrb[0].mxu0 %v224
  %v360 = vpop.f32.mrb[0].mxu0
  %v361 = vadd.f32 0.0, %v360
  %v362 = vpop.f32.mrb[0].mxu0
  %v363 = vpop.f32.mrb[0].mxu0
  %v364 = vadd.f32 0.0, %v363
  %v365 = vpop.f32.mrb[0].mxu0
  %366 = vdwg.mxu0
  %v367 = vadd.f32 %v28, %v361
  %v368 = vadd.f32 %v28, %v364
  %369 = vrot.lane.b32.xlu0 %v67, 44
  %v370 = vpop.permute.xlu0 %369
  %371 = vrot.lane.b32.xlu0 %v68, 44
  %v372 = vpop.permute.xlu0 %371
  %vm373 = vcmask 359424
  %v374 = vsel %vm373, %v370, %v372
  %v377 = vsel %vm158, %v372, 0
  %379 = vmatprep.subr.bf16.mxu0 %v125
  %380 = vmatpush1.bf16.msra.mxu0 %v124
  %381 = vmatprep.subr.bf16.mxu0 %v127
  %382 = vmatpush1.bf16.msra.mxu0 %v126
  %383 = vmatprep.subr.bf16.mxu0 %v129
  %384 = vmatpush1.bf16.msra.mxu0 %v128
  %385 = vmatprep.subr.bf16.mxu0 %v131
  %386 = vmatpush1.bf16.msra.mxu0 %v130
  %387 = vmatprep.subr.bf16.mxu0 %v133
  %388 = vmatpush1.bf16.msra.mxu0 %v132
  %389 = vmatprep.subr.bf16.mxu0 %v135
  %390 = vmatpush1.bf16.msra.mxu0 %v134
  %391 = vmatprep.subr.bf16.mxu0 %v137
  %392 = vmatpush1.bf16.msra.mxu0 %v136
  %393 = vmatprep.subr.bf16.mxu0 %v139
  %394 = vmatpush1.bf16.msra.mxu0 %v138
  %395 = vmatprep.subr.bf16.mxu0 %v167
  %396 = vmatpush1.bf16.msra.mxu0 %v164
  %397 = vmatprep.subr.bf16.mxu0 0
  %398 = vmatpush1.bf16.msra.mxu0 0
  %399 = vmatprep.subr.bf16.mxu0 0
  %400 = vmatpush1.bf16.msra.mxu0 0
  %401 = vmatprep.subr.bf16.mxu0 0
  %402 = vmatpush1.bf16.msra.mxu0 0
  %403 = vmatprep.subr.bf16.mxu0 0
  %404 = vmatpush1.bf16.msra.mxu0 0
  %405 = vmatprep.subr.bf16.mxu0 0
  %406 = vmatpush1.bf16.msra.mxu0 0
  %407 = vmatprep.subr.bf16.mxu0 0
  %408 = vmatpush1.bf16.msra.mxu0 0
  %409 = vmatprep.subr.bf16.mxu0 0
  %410 = vmatpush1.bf16.msra.mxu0 0
  %411 = vmatprep.mubr.bf16.mxu0 %v377
  %412 = vmatmul.mubr.bf16.gmra.mrb[0].mxu0 %v374
  %v413 = vpop.f32.mrb[0].mxu0
  %v414 = vadd.f32 %v54, %v413
  %v415 = vpop.f32.mrb[0].mxu0
  %v416 = vadd.f32 %v58, %v415
  %v417 = vpop.f32.mrb[0].mxu0
  %v418 = vadd.f32 %v54, %v417
  %v419 = vpop.f32.mrb[0].mxu0
  %v420 = vadd.f32 %v58, %v419
  %421 = vdwg.mxu0
  %vm422 = vcmp.ge.f32.partialorder %v414, 0.0
  %vm423 = vcmp.ge.f32.partialorder %v416, 0.0
  %vm424 = vcmp.ge.f32.partialorder %v418, 0.0
  %vm425 = vcmp.ge.f32.partialorder %v420, 0.0
  %v426 = vmul.f32 %v414, 0.01
  %v427 = vmul.f32 %v416, 0.01
  %v428 = vmul.f32 %v418, 0.01
  %v429 = vmul.f32 %v420, 0.01
  %v430 = vsel %vm422, %v414, %v426
  %v431 = vsel %vm423, %v416, %v427
  %v432 = vsel %vm424, %v418, %v428
  %v433 = vsel %vm425, %v420, %v429
  %v434 = vpack.c.bf16 %v432, %v430
  %v435 = vpack.c.bf16 %v433, %v431
  %s436 = scalar_lea.vmem %s3, 96
  %v437 = vld [vmem:[%s436] sm:$0xf]
  %v438 = vld [vmem:[%s436 + $0x4] sm:$0xf]
  %v439 = vld [vmem:[%s436 + $0x8] sm:$0xf]
  %v440 = vld [vmem:[%s436 + $0xc] sm:$0xf]
  %v441 = vld [vmem:[%s436 + $0x10] sm:$0xf]
  %v442 = vld [vmem:[%s436 + $0x14] sm:$0xf]
  %v443 = vld [vmem:[%s436 + $0x18] sm:$0xf]
  %v444 = vld [vmem:[%s436 + $0x1c] sm:$0xf]
  %v445 = vld [vmem:[%s436 + $0x20] sm:$0xf]
  %v446 = vld [vmem:[%s436 + $0x24] sm:$0xf]
  %v447 = vld [vmem:[%s436 + $0x28] sm:$0xf]
  %v448 = vld [vmem:[%s436 + $0x2c] sm:$0xf]
  %v449 = vld [vmem:[%s436 + $0x30] sm:$0xf]
  %v450 = vld [vmem:[%s436 + $0x34] sm:$0xf]
  %v451 = vld [vmem:[%s436 + $0x38] sm:$0xf]
  %v452 = vld [vmem:[%s436 + $0x3c] sm:$0xf]
  %v453 = vld [vmem:[%s436 + $0x40] sm:$0xf]
  %v454 = vld [vmem:[%s436 + $0x44] sm:$0xf]
  %v455 = vld [vmem:[%s436 + $0x48] sm:$0xf]
  %v456 = vld [vmem:[%s436 + $0x4c] sm:$0xf]
  %v457 = vld [vmem:[%s436 + $0x50] sm:$0xf]
  %v458 = vld [vmem:[%s436 + $0x54] sm:$0xf]
  %v459 = vld [vmem:[%s436 + $0x58] sm:$0xf]
  %v460 = vld [vmem:[%s436 + $0x5c] sm:$0xf]
  %v485 = vunpack.c.l.b16 %v437
  %v486 = vunpack.c.l.b16 %v438
  %v487 = vunpack.c.l.b16 %v439
  %v488 = vunpack.c.l.b16 %v440
  %v489 = vunpack.c.l.b16 %v441
  %v490 = vunpack.c.l.b16 %v442
  %v491 = vunpack.c.l.b16 %v443
  %v492 = vunpack.c.l.b16 %v444
  %v493 = vunpack.c.l.b16 %v445
  %v494 = vunpack.c.l.b16 %v446
  %v495 = vunpack.c.l.b16 %v447
  %v496 = vunpack.c.l.b16 %v448
  %v497 = vunpack.c.l.b16 %v449
  %v498 = vunpack.c.l.b16 %v450
  %v499 = vunpack.c.l.b16 %v451
  %v500 = vunpack.c.l.b16 %v452
  %v501 = vunpack.c.l.b16 %v453
  %v502 = vunpack.c.l.b16 %v454
  %v503 = vunpack.c.l.b16 %v455
  %v504 = vunpack.c.l.b16 %v456
  %v505 = vunpack.c.l.b16 %v457
  %v506 = vunpack.c.l.b16 %v458
  %v507 = vunpack.c.l.b16 %v459
  %v508 = vunpack.c.l.b16 %v460
  %v509 = vpack.c.b16 %v486, %v485
  %v510 = vpack.c.b16 %v488, %v487
  %v511 = vpack.c.b16 %v490, %v489
  %v512 = vpack.c.b16 %v492, %v491
  %v513 = vpack.c.b16 %v494, %v493
  %v514 = vpack.c.b16 %v496, %v495
  %v515 = vpack.c.b16 %v498, %v497
  %v516 = vpack.c.b16 %v500, %v499
  %v517 = vpack.c.b16 %v502, %v501
  %v518 = vpack.c.b16 %v504, %v503
  %v519 = vpack.c.b16 %v506, %v505
  %v520 = vpack.c.b16 %v508, %v507
  %v534 = vsel %vm322, %v435, 0
  %536 = vmatprep.subr.bf16.mxu0 0
  %537 = vmatpush1.bf16.msra.mxu0 %v509
  %538 = vmatprep.subr.bf16.mxu0 0
  %539 = vmatpush1.bf16.msra.mxu0 %v510
  %540 = vmatprep.subr.bf16.mxu0 0
  %541 = vmatpush1.bf16.msra.mxu0 %v511
  %542 = vmatprep.subr.bf16.mxu0 0
  %543 = vmatpush1.bf16.msra.mxu0 %v512
  %544 = vmatprep.subr.bf16.mxu0 0
  %545 = vmatpush1.bf16.msra.mxu0 %v513
  %546 = vmatprep.subr.bf16.mxu0 0
  %547 = vmatpush1.bf16.msra.mxu0 %v514
  %548 = vmatprep.subr.bf16.mxu0 0
  %549 = vmatpush1.bf16.msra.mxu0 %v515
  %550 = vmatprep.subr.bf16.mxu0 0
  %551 = vmatpush1.bf16.msra.mxu0 %v516
  %552 = vmatprep.subr.bf16.mxu0 0
  %553 = vmatpush1.bf16.msra.mxu0 %v517
  %554 = vmatprep.subr.bf16.mxu0 0
  %555 = vmatpush1.bf16.msra.mxu0 %v518
  %556 = vmatprep.subr.bf16.mxu0 0
  %557 = vmatpush1.bf16.msra.mxu0 %v519
  %558 = vmatprep.subr.bf16.mxu0 0
  %559 = vmatpush1.bf16.msra.mxu0 %v520
  %560 = vmatprep.subr.bf16.mxu0 0
  %561 = vmatpush1.bf16.msra.mxu0 0
  %562 = vmatprep.subr.bf16.mxu0 0
  %563 = vmatpush1.bf16.msra.mxu0 0
  %564 = vmatprep.subr.bf16.mxu0 0
  %565 = vmatpush1.bf16.msra.mxu0 0
  %566 = vmatprep.subr.bf16.mxu0 0
  %567 = vmatpush1.bf16.msra.mxu0 0
  %568 = vmatprep.mubr.bf16.mxu0 %v534
  %569 = vmatmul.mubr.bf16.gmra.mrb[0].mxu0 %v434
  %v570 = vpop.f32.mrb[0].mxu0
  %v571 = vadd.f32 0.0, %v570
  %v572 = vpop.f32.mrb[0].mxu0
  %v573 = vpop.f32.mrb[0].mxu0
  %v574 = vadd.f32 0.0, %v573
  %v575 = vpop.f32.mrb[0].mxu0
  %576 = vdwg.mxu0
  %v577 = vadd.f32 %v367, %v571
  %v578 = vadd.f32 %v368, %v574
  %v579 = vld [vmem:[%s0 + $0x4] sm:$0xff]
  %v580 = vld [vmem:[%s0 + $0x20] sm:$0xff]
  %v583 = vunpack.c.l.b16 %v579
  %v584 = vunpack.c.h.b16 %v579
  %v585 = vunpack.c.l.b16 %v580
  %v586 = vunpack.c.h.b16 %v580
  %v587 = vpack.c.b16 %v585, %v583
  %v588 = vpack.c.b16 %v586, %v584
  %589 = vrot.lane.b32.xlu0 %v587, 88
  %v590 = vpop.permute.xlu0 %589
  %591 = vrot.lane.b32.xlu0 %v588, 88
  %v592 = vpop.permute.xlu0 %591
  %vm593 = vcmask 719872
  %v594 = vsel %vm593, %v590, %v592
  %v597 = vsel %vm158, %v592, 0
  %599 = vmatprep.subr.bf16.mxu0 %v125
  %600 = vmatpush1.bf16.msra.mxu0 %v124
  %601 = vmatprep.subr.bf16.mxu0 %v127
  %602 = vmatpush1.bf16.msra.mxu0 %v126
  %603 = vmatprep.subr.bf16.mxu0 %v129
  %604 = vmatpush1.bf16.msra.mxu0 %v128
  %605 = vmatprep.subr.bf16.mxu0 %v131
  %606 = vmatpush1.bf16.msra.mxu0 %v130
  %607 = vmatprep.subr.bf16.mxu0 %v133
  %608 = vmatpush1.bf16.msra.mxu0 %v132
  %609 = vmatprep.subr.bf16.mxu0 %v135
  %610 = vmatpush1.bf16.msra.mxu0 %v134
  %611 = vmatprep.subr.bf16.mxu0 %v137
  %612 = vmatpush1.bf16.msra.mxu0 %v136
  %613 = vmatprep.subr.bf16.mxu0 %v139
  %614 = vmatpush1.bf16.msra.mxu0 %v138
  %615 = vmatprep.subr.bf16.mxu0 %v167
  %616 = vmatpush1.bf16.msra.mxu0 %v164
  %617 = vmatprep.subr.bf16.mxu0 0
  %618 = vmatpush1.bf16.msra.mxu0 0
  %619 = vmatprep.subr.bf16.mxu0 0
  %620 = vmatpush1.bf16.msra.mxu0 0
  %621 = vmatprep.subr.bf16.mxu0 0
  %622 = vmatpush1.bf16.msra.mxu0 0
  %623 = vmatprep.subr.bf16.mxu0 0
  %624 = vmatpush1.bf16.msra.mxu0 0
  %625 = vmatprep.subr.bf16.mxu0 0
  %626 = vmatpush1.bf16.msra.mxu0 0
  %627 = vmatprep.subr.bf16.mxu0 0
  %628 = vmatpush1.bf16.msra.mxu0 0
  %629 = vmatprep.subr.bf16.mxu0 0
  %630 = vmatpush1.bf16.msra.mxu0 0
  %631 = vmatprep.mubr.bf16.mxu0 %v597
  %632 = vmatmul.mubr.bf16.gmra.mrb[0].mxu0 %v594
  %v633 = vpop.f32.mrb[0].mxu0
  %v634 = vadd.f32 %v54, %v633
  %v635 = vpop.f32.mrb[0].mxu0
  %v636 = vadd.f32 %v58, %v635
  %v637 = vpop.f32.mrb[0].mxu0
  %v638 = vadd.f32 %v54, %v637
  %v639 = vpop.f32.mrb[0].mxu0
  %v640 = vadd.f32 %v58, %v639
  %641 = vdwg.mxu0
  %vm642 = vcmp.ge.f32.partialorder %v634, 0.0
  %vm643 = vcmp.ge.f32.partialorder %v636, 0.0
  %vm644 = vcmp.ge.f32.partialorder %v638, 0.0
  %vm645 = vcmp.ge.f32.partialorder %v640, 0.0
  %v646 = vmul.f32 %v634, 0.01
  %v647 = vmul.f32 %v636, 0.01
  %v648 = vmul.f32 %v638, 0.01
  %v649 = vmul.f32 %v640, 0.01
  %v650 = vsel %vm642, %v634, %v646
  %v651 = vsel %vm643, %v636, %v647
  %v652 = vsel %vm644, %v638, %v648
  %v653 = vsel %vm645, %v640, %v649
  %v654 = vpack.c.bf16 %v652, %v650
  %v655 = vpack.c.bf16 %v653, %v651
  %s656 = scalar_lea.vmem %s3, 192
  %v657 = vld [vmem:[%s656] sm:$0xf]
  %v658 = vld [vmem:[%s656 + $0x4] sm:$0xf]
  %v659 = vld [vmem:[%s656 + $0x8] sm:$0xf]
  %v660 = vld [vmem:[%s656 + $0xc] sm:$0xf]
  %v661 = vld [vmem:[%s656 + $0x10] sm:$0xf]
  %v662 = vld [vmem:[%s656 + $0x14] sm:$0xf]
  %v663 = vld [vmem:[%s656 + $0x18] sm:$0xf]
  %v664 = vld [vmem:[%s656 + $0x1c] sm:$0xf]
  %v665 = vld [vmem:[%s656 + $0x20] sm:$0xf]
  %v666 = vld [vmem:[%s656 + $0x24] sm:$0xf]
  %v667 = vld [vmem:[%s656 + $0x28] sm:$0xf]
  %v668 = vld [vmem:[%s656 + $0x2c] sm:$0xf]
  %v669 = vld [vmem:[%s656 + $0x30] sm:$0xf]
  %v670 = vld [vmem:[%s656 + $0x34] sm:$0xf]
  %v671 = vld [vmem:[%s656 + $0x38] sm:$0xf]
  %v672 = vld [vmem:[%s656 + $0x3c] sm:$0xf]
  %v673 = vld [vmem:[%s656 + $0x40] sm:$0xf]
  %v674 = vld [vmem:[%s656 + $0x44] sm:$0xf]
  %v675 = vld [vmem:[%s656 + $0x48] sm:$0xf]
  %v676 = vld [vmem:[%s656 + $0x4c] sm:$0xf]
  %v677 = vld [vmem:[%s656 + $0x50] sm:$0xf]
  %v678 = vld [vmem:[%s656 + $0x54] sm:$0xf]
  %v679 = vld [vmem:[%s656 + $0x58] sm:$0xf]
  %v680 = vld [vmem:[%s656 + $0x5c] sm:$0xf]
  %v705 = vunpack.c.l.b16 %v657
  %v706 = vunpack.c.l.b16 %v658
  %v707 = vunpack.c.l.b16 %v659
  %v708 = vunpack.c.l.b16 %v660
  %v709 = vunpack.c.l.b16 %v661
  %v710 = vunpack.c.l.b16 %v662
  %v711 = vunpack.c.l.b16 %v663
  %v712 = vunpack.c.l.b16 %v664
  %v713 = vunpack.c.l.b16 %v665
  %v714 = vunpack.c.l.b16 %v666
  %v715 = vunpack.c.l.b16 %v667
  %v716 = vunpack.c.l.b16 %v668
  %v717 = vunpack.c.l.b16 %v669
  %v718 = vunpack.c.l.b16 %v670
  %v719 = vunpack.c.l.b16 %v671
  %v720 = vunpack.c.l.b16 %v672
  %v721 = vunpack.c.l.b16 %v673
  %v722 = vunpack.c.l.b16 %v674
  %v723 = vunpack.c.l.b16 %v675
  %v724 = vunpack.c.l.b16 %v676
  %v725 = vunpack.c.l.b16 %v677
  %v726 = vunpack.c.l.b16 %v678
  %v727 = vunpack.c.l.b16 %v679
  %v728 = vunpack.c.l.b16 %v680
  %v729 = vpack.c.b16 %v706, %v705
  %v730 = vpack.c.b16 %v708, %v707
  %v731 = vpack.c.b16 %v710, %v709
  %v732 = vpack.c.b16 %v712, %v711
  %v733 = vpack.c.b16 %v714, %v713
  %v734 = vpack.c.b16 %v716, %v715
  %v735 = vpack.c.b16 %v718, %v717
  %v736 = vpack.c.b16 %v720, %v719
  %v737 = vpack.c.b16 %v722, %v721
  %v738 = vpack.c.b16 %v724, %v723
  %v739 = vpack.c.b16 %v726, %v725
  %v740 = vpack.c.b16 %v728, %v727
  %v754 = vsel %vm322, %v655, 0
  %756 = vmatprep.subr.bf16.mxu0 0
  %757 = vmatpush1.bf16.msra.mxu0 %v729
  %758 = vmatprep.subr.bf16.mxu0 0
  %759 = vmatpush1.bf16.msra.mxu0 %v730
  %760 = vmatprep.subr.bf16.mxu0 0
  %761 = vmatpush1.bf16.msra.mxu0 %v731
  %762 = vmatprep.subr.bf16.mxu0 0
  %763 = vmatpush1.bf16.msra.mxu0 %v732
  %764 = vmatprep.subr.bf16.mxu0 0
  %765 = vmatpush1.bf16.msra.mxu0 %v733
  %766 = vmatprep.subr.bf16.mxu0 0
  %767 = vmatpush1.bf16.msra.mxu0 %v734
  %768 = vmatprep.subr.bf16.mxu0 0
  %769 = vmatpush1.bf16.msra.mxu0 %v735
  %770 = vmatprep.subr.bf16.mxu0 0
  %771 = vmatpush1.bf16.msra.mxu0 %v736
  %772 = vmatprep.subr.bf16.mxu0 0
  %773 = vmatpush1.bf16.msra.mxu0 %v737
  %774 = vmatprep.subr.bf16.mxu0 0
  %775 = vmatpush1.bf16.msra.mxu0 %v738
  %776 = vmatprep.subr.bf16.mxu0 0
  %777 = vmatpush1.bf16.msra.mxu0 %v739
  %778 = vmatprep.subr.bf16.mxu0 0
  %779 = vmatpush1.bf16.msra.mxu0 %v740
  %780 = vmatprep.subr.bf16.mxu0 0
  %781 = vmatpush1.bf16.msra.mxu0 0
  %782 = vmatprep.subr.bf16.mxu0 0
  %783 = vmatpush1.bf16.msra.mxu0 0
  %784 = vmatprep.subr.bf16.mxu0 0
  %785 = vmatpush1.bf16.msra.mxu0 0
  %786 = vmatprep.subr.bf16.mxu0 0
  %787 = vmatpush1.bf16.msra.mxu0 0
  %788 = vmatprep.mubr.bf16.mxu0 %v754
  %789 = vmatmul.mubr.bf16.gmra.mrb[0].mxu0 %v654
  %v790 = vpop.f32.mrb[0].mxu0
  %v791 = vadd.f32 0.0, %v790
  %v792 = vpop.f32.mrb[0].mxu0
  %v793 = vpop.f32.mrb[0].mxu0
  %v794 = vadd.f32 0.0, %v793
  %v795 = vpop.f32.mrb[0].mxu0
  %796 = vdwg.mxu0
  %v797 = vadd.f32 %v577, %v791
  %v798 = vadd.f32 %v578, %v794
  %v799 = vld [vmem:[%s0 + $0x4] sm:$0xff]
  %v800 = vld [vmem:[%s0 + $0xc] sm:$0xf]
  %v801 = vld [vmem:[%s0 + $0x20] sm:$0xff]
  %v802 = vld [vmem:[%s0 + $0x28] sm:$0xf]
  %v807 = vunpack.c.l.b16 %v799
  %v808 = vunpack.c.h.b16 %v799
  %v809 = vunpack.c.l.b16 %v800
  %v810 = vunpack.c.l.b16 %v801
  %v811 = vunpack.c.h.b16 %v801
  %v812 = vunpack.c.l.b16 %v802
  %v813 = vpack.c.b16 %v810, %v807
  %v814 = vpack.c.b16 %v811, %v808
  %v815 = vpack.c.b16 %v812, %v809
  %816 = vrot.lane.b32.xlu0 %v813, 4
  %v817 = vpop.permute.xlu0 %816
  %818 = vrot.lane.b32.xlu0 %v814, 4
  %v819 = vpop.permute.xlu0 %818
  %820 = vrot.lane.b32.xlu0 %v815, 4
  %v821 = vpop.permute.xlu0 %820
  %vm822 = vcmask 31744
  %v823 = vsel %vm822, %v817, %v819
  %v824 = vsel %vm822, %v819, %v821
  %v827 = vsel %vm158, %v824, 0
  %829 = vmatprep.subr.bf16.mxu0 %v125
  %830 = vmatpush1.bf16.msra.mxu0 %v124
  %831 = vmatprep.subr.bf16.mxu0 %v127
  %832 = vmatpush1.bf16.msra.mxu0 %v126
  %833 = vmatprep.subr.bf16.mxu0 %v129
  %834 = vmatpush1.bf16.msra.mxu0 %v128
  %835 = vmatprep.subr.bf16.mxu0 %v131
  %836 = vmatpush1.bf16.msra.mxu0 %v130
  %837 = vmatprep.subr.bf16.mxu0 %v133
  %838 = vmatpush1.bf16.msra.mxu0 %v132
  %839 = vmatprep.subr.bf16.mxu0 %v135
  %840 = vmatpush1.bf16.msra.mxu0 %v134
  %841 = vmatprep.subr.bf16.mxu0 %v137
  %842 = vmatpush1.bf16.msra.mxu0 %v136
  %843 = vmatprep.subr.bf16.mxu0 %v139
  %844 = vmatpush1.bf16.msra.mxu0 %v138
  %845 = vmatprep.subr.bf16.mxu0 %v167
  %846 = vmatpush1.bf16.msra.mxu0 %v164
  %847 = vmatprep.subr.bf16.mxu0 0
  %848 = vmatpush1.bf16.msra.mxu0 0
  %849 = vmatprep.subr.bf16.mxu0 0
  %850 = vmatpush1.bf16.msra.mxu0 0
  %851 = vmatprep.subr.bf16.mxu0 0
  %852 = vmatpush1.bf16.msra.mxu0 0
  %853 = vmatprep.subr.bf16.mxu0 0
  %854 = vmatpush1.bf16.msra.mxu0 0
  %855 = vmatprep.subr.bf16.mxu0 0
  %856 = vmatpush1.bf16.msra.mxu0 0
  %857 = vmatprep.subr.bf16.mxu0 0
  %858 = vmatpush1.bf16.msra.mxu0 0
  %859 = vmatprep.subr.bf16.mxu0 0
  %860 = vmatpush1.bf16.msra.mxu0 0
  %861 = vmatprep.mubr.bf16.mxu0 %v827
  %862 = vmatmul.mubr.bf16.gmra.mrb[0].mxu0 %v823
  %v863 = vpop.f32.mrb[0].mxu0
  %v864 = vadd.f32 %v54, %v863
  %v865 = vpop.f32.mrb[0].mxu0
  %v866 = vadd.f32 %v58, %v865
  %v867 = vpop.f32.mrb[0].mxu0
  %v868 = vadd.f32 %v54, %v867
  %v869 = vpop.f32.mrb[0].mxu0
  %v870 = vadd.f32 %v58, %v869
  %871 = vdwg.mxu0
  %vm872 = vcmp.ge.f32.partialorder %v864, 0.0
  %vm873 = vcmp.ge.f32.partialorder %v866, 0.0
  %vm874 = vcmp.ge.f32.partialorder %v868, 0.0
  %vm875 = vcmp.ge.f32.partialorder %v870, 0.0
  %v876 = vmul.f32 %v864, 0.01
  %v877 = vmul.f32 %v866, 0.01
  %v878 = vmul.f32 %v868, 0.01
  %v879 = vmul.f32 %v870, 0.01
  %v880 = vsel %vm872, %v864, %v876
  %v881 = vsel %vm873, %v866, %v877
  %v882 = vsel %vm874, %v868, %v878
  %v883 = vsel %vm875, %v870, %v879
  %v884 = vpack.c.bf16 %v882, %v880
  %v885 = vpack.c.bf16 %v883, %v881
  %s886 = scalar_lea.vmem %s3, 288
  %v887 = vld [vmem:[%s886] sm:$0xf]
  %v888 = vld [vmem:[%s886 + $0x4] sm:$0xf]
  %v889 = vld [vmem:[%s886 + $0x8] sm:$0xf]
  %v890 = vld [vmem:[%s886 + $0xc] sm:$0xf]
  %v891 = vld [vmem:[%s886 + $0x10] sm:$0xf]
  %v892 = vld [vmem:[%s886 + $0x14] sm:$0xf]
  %v893 = vld [vmem:[%s886 + $0x18] sm:$0xf]
  %v894 = vld [vmem:[%s886 + $0x1c] sm:$0xf]
  %v895 = vld [vmem:[%s886 + $0x20] sm:$0xf]
  %v896 = vld [vmem:[%s886 + $0x24] sm:$0xf]
  %v897 = vld [vmem:[%s886 + $0x28] sm:$0xf]
  %v898 = vld [vmem:[%s886 + $0x2c] sm:$0xf]
  %v899 = vld [vmem:[%s886 + $0x30] sm:$0xf]
  %v900 = vld [vmem:[%s886 + $0x34] sm:$0xf]
  %v901 = vld [vmem:[%s886 + $0x38] sm:$0xf]
  %v902 = vld [vmem:[%s886 + $0x3c] sm:$0xf]
  %v903 = vld [vmem:[%s886 + $0x40] sm:$0xf]
  %v904 = vld [vmem:[%s886 + $0x44] sm:$0xf]
  %v905 = vld [vmem:[%s886 + $0x48] sm:$0xf]
  %v906 = vld [vmem:[%s886 + $0x4c] sm:$0xf]
  %v907 = vld [vmem:[%s886 + $0x50] sm:$0xf]
  %v908 = vld [vmem:[%s886 + $0x54] sm:$0xf]
  %v909 = vld [vmem:[%s886 + $0x58] sm:$0xf]
  %v910 = vld [vmem:[%s886 + $0x5c] sm:$0xf]
  %v935 = vunpack.c.l.b16 %v887
  %v936 = vunpack.c.l.b16 %v888
  %v937 = vunpack.c.l.b16 %v889
  %v938 = vunpack.c.l.b16 %v890
  %v939 = vunpack.c.l.b16 %v891
  %v940 = vunpack.c.l.b16 %v892
  %v941 = vunpack.c.l.b16 %v893
  %v942 = vunpack.c.l.b16 %v894
  %v943 = vunpack.c.l.b16 %v895
  %v944 = vunpack.c.l.b16 %v896
  %v945 = vunpack.c.l.b16 %v897
  %v946 = vunpack.c.l.b16 %v898
  %v947 = vunpack.c.l.b16 %v899
  %v948 = vunpack.c.l.b16 %v900
  %v949 = vunpack.c.l.b16 %v901
  %v950 = vunpack.c.l.b16 %v902
  %v951 = vunpack.c.l.b16 %v903
  %v952 = vunpack.c.l.b16 %v904
  %v953 = vunpack.c.l.b16 %v905
  %v954 = vunpack.c.l.b16 %v906
  %v955 = vunpack.c.l.b16 %v907
  %v956 = vunpack.c.l.b16 %v908
  %v957 = vunpack.c.l.b16 %v909
  %v958 = vunpack.c.l.b16 %v910
  %v959 = vpack.c.b16 %v936, %v935
  %v960 = vpack.c.b16 %v938, %v937
  %v961 = vpack.c.b16 %v940, %v939
  %v962 = vpack.c.b16 %v942, %v941
  %v963 = vpack.c.b16 %v944, %v943
  %v964 = vpack.c.b16 %v946, %v945
  %v965 = vpack.c.b16 %v948, %v947
  %v966 = vpack.c.b16 %v950, %v949
  %v967 = vpack.c.b16 %v952, %v951
  %v968 = vpack.c.b16 %v954, %v953
  %v969 = vpack.c.b16 %v956, %v955
  %v970 = vpack.c.b16 %v958, %v957
  %v984 = vsel %vm322, %v885, 0
  %986 = vmatprep.subr.bf16.mxu0 0
  %987 = vmatpush1.bf16.msra.mxu0 %v959
  %988 = vmatprep.subr.bf16.mxu0 0
  %989 = vmatpush1.bf16.msra.mxu0 %v960
  %990 = vmatprep.subr.bf16.mxu0 0
  %991 = vmatpush1.bf16.msra.mxu0 %v961
  %992 = vmatprep.subr.bf16.mxu0 0
  %993 = vmatpush1.bf16.msra.mxu0 %v962
  %994 = vmatprep.subr.bf16.mxu0 0
  %995 = vmatpush1.bf16.msra.mxu0 %v963
  %996 = vmatprep.subr.bf16.mxu0 0
  %997 = vmatpush1.bf16.msra.mxu0 %v964
  %998 = vmatprep.subr.bf16.mxu0 0
  %999 = vmatpush1.bf16.msra.mxu0 %v965
  %1000 = vmatprep.subr.bf16.mxu0 0
  %1001 = vmatpush1.bf16.msra.mxu0 %v966
  %1002 = vmatprep.subr.bf16.mxu0 0
  %1003 = vmatpush1.bf16.msra.mxu0 %v967
  %1004 = vmatprep.subr.bf16.mxu0 0
  %1005 = vmatpush1.bf16.msra.mxu0 %v968
  %1006 = vmatprep.subr.bf16.mxu0 0
  %1007 = vmatpush1.bf16.msra.mxu0 %v969
  %1008 = vmatprep.subr.bf16.mxu0 0
  %1009 = vmatpush1.bf16.msra.mxu0 %v970
  %1010 = vmatprep.subr.bf16.mxu0 0
  %1011 = vmatpush1.bf16.msra.mxu0 0
  %1012 = vmatprep.subr.bf16.mxu0 0
  %1013 = vmatpush1.bf16.msra.mxu0 0
  %1014 = vmatprep.subr.bf16.mxu0 0
  %1015 = vmatpush1.bf16.msra.mxu0 0
  %1016 = vmatprep.subr.bf16.mxu0 0
  %1017 = vmatpush1.bf16.msra.mxu0 0
  %1018 = vmatprep.mubr.bf16.mxu0 %v984
  %1019 = vmatmul.mubr.bf16.gmra.mrb[0].mxu0 %v884
  %v1020 = vpop.f32.mrb[0].mxu0
  %v1021 = vadd.f32 0.0, %v1020
  %v1022 = vpop.f32.mrb[0].mxu0
  %v1023 = vpop.f32.mrb[0].mxu0
  %v1024 = vadd.f32 0.0, %v1023
  %v1025 = vpop.f32.mrb[0].mxu0
  %1026 = vdwg.mxu0
  %v1027 = vadd.f32 %v797, %v1021
  %v1028 = vadd.f32 %v798, %v1024
  %v1029 = vld [vmem:[%s0 + $0x8] sm:$0xff]
  %v1030 = vld [vmem:[%s0 + $0x24] sm:$0xff]
  %v1033 = vunpack.c.l.b16 %v1029
  %v1034 = vunpack.c.h.b16 %v1029
  %v1035 = vunpack.c.l.b16 %v1030
  %v1036 = vunpack.c.h.b16 %v1030
  %v1037 = vpack.c.b16 %v1035, %v1033
  %v1038 = vpack.c.b16 %v1036, %v1034
  %1039 = vrot.lane.b32.xlu0 %v1037, 48
  %v1040 = vpop.permute.xlu0 %1039
  %1041 = vrot.lane.b32.xlu0 %v1038, 48
  %v1042 = vpop.permute.xlu0 %1041
  %vm1043 = vcmask 392192
  %v1044 = vsel %vm1043, %v1040, %v1042
  %v1047 = vsel %vm158, %v1042, 0
  %1049 = vmatprep.subr.bf16.mxu0 %v125
  %1050 = vmatpush1.bf16.msra.mxu0 %v124
  %1051 = vmatprep.subr.bf16.mxu0 %v127
  %1052 = vmatpush1.bf16.msra.mxu0 %v126
  %1053 = vmatprep.subr.bf16.mxu0 %v129
  %1054 = vmatpush1.bf16.msra.mxu0 %v128
  %1055 = vmatprep.subr.bf16.mxu0 %v131
  %1056 = vmatpush1.bf16.msra.mxu0 %v130
  %1057 = vmatprep.subr.bf16.mxu0 %v133
  %1058 = vmatpush1.bf16.msra.mxu0 %v132
  %1059 = vmatprep.subr.bf16.mxu0 %v135
  %1060 = vmatpush1.bf16.msra.mxu0 %v134
  %1061 = vmatprep.subr.bf16.mxu0 %v137
  %1062 = vmatpush1.bf16.msra.mxu0 %v136
  %1063 = vmatprep.subr.bf16.mxu0 %v139
  %1064 = vmatpush1.bf16.msra.mxu0 %v138
  %1065 = vmatprep.subr.bf16.mxu0 %v167
  %1066 = vmatpush1.bf16.msra.mxu0 %v164
  %1067 = vmatprep.subr.bf16.mxu0 0
  %1068 = vmatpush1.bf16.msra.mxu0 0
  %1069 = vmatprep.subr.bf16.mxu0 0
  %1070 = vmatpush1.bf16.msra.mxu0 0
  %1071 = vmatprep.subr.bf16.mxu0 0
  %1072 = vmatpush1.bf16.msra.mxu0 0
  %1073 = vmatprep.subr.bf16.mxu0 0
  %1074 = vmatpush1.bf16.msra.mxu0 0
  %1075 = vmatprep.subr.bf16.mxu0 0
  %1076 = vmatpush1.bf16.msra.mxu0 0
  %1077 = vmatprep.subr.bf16.mxu0 0
  %1078 = vmatpush1.bf16.msra.mxu0 0
  %1079 = vmatprep.subr.bf16.mxu0 0
  %1080 = vmatpush1.bf16.msra.mxu0 0
  %1081 = vmatprep.mubr.bf16.mxu0 %v1047
  %1082 = vmatmul.mubr.bf16.gmra.mrb[0].mxu0 %v1044
  %v1083 = vpop.f32.mrb[0].mxu0
  %v1084 = vadd.f32 %v54, %v1083
  %v1085 = vpop.f32.mrb[0].mxu0
  %v1086 = vadd.f32 %v58, %v1085
  %v1087 = vpop.f32.mrb[0].mxu0
  %v1088 = vadd.f32 %v54, %v1087
  %v1089 = vpop.f32.mrb[0].mxu0
  %v1090 = vadd.f32 %v58, %v1089
  %1091 = vdwg.mxu0
  %vm1092 = vcmp.ge.f32.partialorder %v1084, 0.0
  %vm1093 = vcmp.ge.f32.partialorder %v1086, 0.0
  %vm1094 = vcmp.ge.f32.partialorder %v1088, 0.0
  %vm1095 = vcmp.ge.f32.partialorder %v1090, 0.0
  %v1096 = vmul.f32 %v1084, 0.01
  %v1097 = vmul.f32 %v1086, 0.01
  %v1098 = vmul.f32 %v1088, 0.01
  %v1099 = vmul.f32 %v1090, 0.01
  %v1100 = vsel %vm1092, %v1084, %v1096
  %v1101 = vsel %vm1093, %v1086, %v1097
  %v1102 = vsel %vm1094, %v1088, %v1098
  %v1103 = vsel %vm1095, %v1090, %v1099
  %v1104 = vpack.c.bf16 %v1102, %v1100
  %v1105 = vpack.c.bf16 %v1103, %v1101
  %s1106 = scalar_lea.vmem %s3, 384
  %v1107 = vld [vmem:[%s1106] sm:$0xf]
  %v1108 = vld [vmem:[%s1106 + $0x4] sm:$0xf]
  %v1109 = vld [vmem:[%s1106 + $0x8] sm:$0xf]
  %v1110 = vld [vmem:[%s1106 + $0xc] sm:$0xf]
  %v1111 = vld [vmem:[%s1106 + $0x10] sm:$0xf]
  %v1112 = vld [vmem:[%s1106 + $0x14] sm:$0xf]
  %v1113 = vld [vmem:[%s1106 + $0x18] sm:$0xf]
  %v1114 = vld [vmem:[%s1106 + $0x1c] sm:$0xf]
  %v1115 = vld [vmem:[%s1106 + $0x20] sm:$0xf]
  %v1116 = vld [vmem:[%s1106 + $0x24] sm:$0xf]
  %v1117 = vld [vmem:[%s1106 + $0x28] sm:$0xf]
  %v1118 = vld [vmem:[%s1106 + $0x2c] sm:$0xf]
  %v1119 = vld [vmem:[%s1106 + $0x30] sm:$0xf]
  %v1120 = vld [vmem:[%s1106 + $0x34] sm:$0xf]
  %v1121 = vld [vmem:[%s1106 + $0x38] sm:$0xf]
  %v1122 = vld [vmem:[%s1106 + $0x3c] sm:$0xf]
  %v1123 = vld [vmem:[%s1106 + $0x40] sm:$0xf]
  %v1124 = vld [vmem:[%s1106 + $0x44] sm:$0xf]
  %v1125 = vld [vmem:[%s1106 + $0x48] sm:$0xf]
  %v1126 = vld [vmem:[%s1106 + $0x4c] sm:$0xf]
  %v1127 = vld [vmem:[%s1106 + $0x50] sm:$0xf]
  %v1128 = vld [vmem:[%s1106 + $0x54] sm:$0xf]
  %v1129 = vld [vmem:[%s1106 + $0x58] sm:$0xf]
  %v1130 = vld [vmem:[%s1106 + $0x5c] sm:$0xf]
  %v1155 = vunpack.c.l.b16 %v1107
  %v1156 = vunpack.c.l.b16 %v1108
  %v1157 = vunpack.c.l.b16 %v1109
  %v1158 = vunpack.c.l.b16 %v1110
  %v1159 = vunpack.c.l.b16 %v1111
  %v1160 = vunpack.c.l.b16 %v1112
  %v1161 = vunpack.c.l.b16 %v1113
  %v1162 = vunpack.c.l.b16 %v1114
  %v1163 = vunpack.c.l.b16 %v1115
  %v1164 = vunpack.c.l.b16 %v1116
  %v1165 = vunpack.c.l.b16 %v1117
  %v1166 = vunpack.c.l.b16 %v1118
  %v1167 = vunpack.c.l.b16 %v1119
  %v1168 = vunpack.c.l.b16 %v1120
  %v1169 = vunpack.c.l.b16 %v1121
  %v1170 = vunpack.c.l.b16 %v1122
  %v1171 = vunpack.c.l.b16 %v1123
  %v1172 = vunpack.c.l.b16 %v1124
  %v1173 = vunpack.c.l.b16 %v1125
  %v1174 = vunpack.c.l.b16 %v1126
  %v1175 = vunpack.c.l.b16 %v1127
  %v1176 = vunpack.c.l.b16 %v1128
  %v1177 = vunpack.c.l.b16 %v1129
  %v1178 = vunpack.c.l.b16 %v1130
  %v1179 = vpack.c.b16 %v1156, %v1155
  %v1180 = vpack.c.b16 %v1158, %v1157
  %v1181 = vpack.c.b16 %v1160, %v1159
  %v1182 = vpack.c.b16 %v1162, %v1161
  %v1183 = vpack.c.b16 %v1164, %v1163
  %v1184 = vpack.c.b16 %v1166, %v1165
  %v1185 = vpack.c.b16 %v1168, %v1167
  %v1186 = vpack.c.b16 %v1170, %v1169
  %v1187 = vpack.c.b16 %v1172, %v1171
  %v1188 = vpack.c.b16 %v1174, %v1173
  %v1189 = vpack.c.b16 %v1176, %v1175
  %v1190 = vpack.c.b16 %v1178, %v1177
  %v1204 = vsel %vm322, %v1105, 0
  %1206 = vmatprep.subr.bf16.mxu0 0
  %1207 = vmatpush1.bf16.msra.mxu0 %v1179
  %1208 = vmatprep.subr.bf16.mxu0 0
  %1209 = vmatpush1.bf16.msra.mxu0 %v1180
  %1210 = vmatprep.subr.bf16.mxu0 0
  %1211 = vmatpush1.bf16.msra.mxu0 %v1181
  %1212 = vmatprep.subr.bf16.mxu0 0
  %1213 = vmatpush1.bf16.msra.mxu0 %v1182
  %1214 = vmatprep.subr.bf16.mxu0 0
  %1215 = vmatpush1.bf16.msra.mxu0 %v1183
  %1216 = vmatprep.subr.bf16.mxu0 0
  %1217 = vmatpush1.bf16.msra.mxu0 %v1184
  %1218 = vmatprep.subr.bf16.mxu0 0
  %1219 = vmatpush1.bf16.msra.mxu0 %v1185
  %1220 = vmatprep.subr.bf16.mxu0 0
  %1221 = vmatpush1.bf16.msra.mxu0 %v1186
  %1222 = vmatprep.subr.bf16.mxu0 0
  %1223 = vmatpush1.bf16.msra.mxu0 %v1187
  %1224 = vmatprep.subr.bf16.mxu0 0
  %1225 = vmatpush1.bf16.msra.mxu0 %v1188
  %1226 = vmatprep.subr.bf16.mxu0 0
  %1227 = vmatpush1.bf16.msra.mxu0 %v1189
  %1228 = vmatprep.subr.bf16.mxu0 0
  %1229 = vmatpush1.bf16.msra.mxu0 %v1190
  %1230 = vmatprep.subr.bf16.mxu0 0
  %1231 = vmatpush1.bf16.msra.mxu0 0
  %1232 = vmatprep.subr.bf16.mxu0 0
  %1233 = vmatpush1.bf16.msra.mxu0 0
  %1234 = vmatprep.subr.bf16.mxu0 0
  %1235 = vmatpush1.bf16.msra.mxu0 0
  %1236 = vmatprep.subr.bf16.mxu0 0
  %1237 = vmatpush1.bf16.msra.mxu0 0
  %1238 = vmatprep.mubr.bf16.mxu0 %v1204
  %1239 = vmatmul.mubr.bf16.gmra.mrb[0].mxu0 %v1104
  %v1240 = vpop.f32.mrb[0].mxu0
  %v1241 = vadd.f32 0.0, %v1240
  %v1242 = vpop.f32.mrb[0].mxu0
  %v1243 = vpop.f32.mrb[0].mxu0
  %v1244 = vadd.f32 0.0, %v1243
  %v1245 = vpop.f32.mrb[0].mxu0
  %1246 = vdwg.mxu0
  %v1247 = vadd.f32 %v1027, %v1241
  %v1248 = vadd.f32 %v1028, %v1244
  %v1249 = vld [vmem:[%s0 + $0xc] sm:$0xff]
  %v1250 = vld [vmem:[%s0 + $0x28] sm:$0xff]
  %v1253 = vunpack.c.l.b16 %v1249
  %v1254 = vunpack.c.h.b16 %v1249
  %v1255 = vunpack.c.l.b16 %v1250
  %v1256 = vunpack.c.h.b16 %v1250
  %v1257 = vpack.c.b16 %v1255, %v1253
  %v1258 = vpack.c.b16 %v1256, %v1254
  %1259 = vrot.lane.b32.xlu0 %v1257, 92
  %v1260 = vpop.permute.xlu0 %1259
  %1261 = vrot.lane.b32.xlu0 %v1258, 92
  %v1262 = vpop.permute.xlu0 %1261
  %vm1263 = vcmask 752640
  %v1264 = vsel %vm1263, %v1260, %v1262
  %v1267 = vsel %vm158, %v1262, 0
  %1269 = vmatprep.subr.bf16.mxu0 %v125
  %1270 = vmatpush1.bf16.msra.mxu0 %v124
  %1271 = vmatprep.subr.bf16.mxu0 %v127
  %1272 = vmatpush1.bf16.msra.mxu0 %v126
  %1273 = vmatprep.subr.bf16.mxu0 %v129
  %1274 = vmatpush1.bf16.msra.mxu0 %v128
  %1275 = vmatprep.subr.bf16.mxu0 %v131
  %1276 = vmatpush1.bf16.msra.mxu0 %v130
  %1277 = vmatprep.subr.bf16.mxu0 %v133
  %1278 = vmatpush1.bf16.msra.mxu0 %v132
  %1279 = vmatprep.subr.bf16.mxu0 %v135
  %1280 = vmatpush1.bf16.msra.mxu0 %v134
  %1281 = vmatprep.subr.bf16.mxu0 %v137
  %1282 = vmatpush1.bf16.msra.mxu0 %v136
  %1283 = vmatprep.subr.bf16.mxu0 %v139
  %1284 = vmatpush1.bf16.msra.mxu0 %v138
  %1285 = vmatprep.subr.bf16.mxu0 %v167
  %1286 = vmatpush1.bf16.msra.mxu0 %v164
  %1287 = vmatprep.subr.bf16.mxu0 0
  %1288 = vmatpush1.bf16.msra.mxu0 0
  %1289 = vmatprep.subr.bf16.mxu0 0
  %1290 = vmatpush1.bf16.msra.mxu0 0
  %1291 = vmatprep.subr.bf16.mxu0 0
  %1292 = vmatpush1.bf16.msra.mxu0 0
  %1293 = vmatprep.subr.bf16.mxu0 0
  %1294 = vmatpush1.bf16.msra.mxu0 0
  %1295 = vmatprep.subr.bf16.mxu0 0
  %1296 = vmatpush1.bf16.msra.mxu0 0
  %1297 = vmatprep.subr.bf16.mxu0 0
  %1298 = vmatpush1.bf16.msra.mxu0 0
  %1299 = vmatprep.subr.bf16.mxu0 0
  %1300 = vmatpush1.bf16.msra.mxu0 0
  %1301 = vmatprep.mubr.bf16.mxu0 %v1267
  %1302 = vmatmul.mubr.bf16.gmra.mrb[0].mxu0 %v1264
  %v1303 = vpop.f32.mrb[0].mxu0
  %v1304 = vadd.f32 %v54, %v1303
  %v1305 = vpop.f32.mrb[0].mxu0
  %v1306 = vadd.f32 %v58, %v1305
  %v1307 = vpop.f32.mrb[0].mxu0
  %v1308 = vadd.f32 %v54, %v1307
  %v1309 = vpop.f32.mrb[0].mxu0
  %v1310 = vadd.f32 %v58, %v1309
  %1311 = vdwg.mxu0
  %vm1312 = vcmp.ge.f32.partialorder %v1304, 0.0
  %vm1313 = vcmp.ge.f32.partialorder %v1306, 0.0
  %vm1314 = vcmp.ge.f32.partialorder %v1308, 0.0
  %vm1315 = vcmp.ge.f32.partialorder %v1310, 0.0
  %v1316 = vmul.f32 %v1304, 0.01
  %v1317 = vmul.f32 %v1306, 0.01
  %v1318 = vmul.f32 %v1308, 0.01
  %v1319 = vmul.f32 %v1310, 0.01
  %v1320 = vsel %vm1312, %v1304, %v1316
  %v1321 = vsel %vm1313, %v1306, %v1317
  %v1322 = vsel %vm1314, %v1308, %v1318
  %v1323 = vsel %vm1315, %v1310, %v1319
  %v1324 = vpack.c.bf16 %v1322, %v1320
  %v1325 = vpack.c.bf16 %v1323, %v1321
  %s1326 = scalar_lea.vmem %s3, 480
  %v1327 = vld [vmem:[%s1326] sm:$0xf]
  %v1328 = vld [vmem:[%s1326 + $0x4] sm:$0xf]
  %v1329 = vld [vmem:[%s1326 + $0x8] sm:$0xf]
  %v1330 = vld [vmem:[%s1326 + $0xc] sm:$0xf]
  %v1331 = vld [vmem:[%s1326 + $0x10] sm:$0xf]
  %v1332 = vld [vmem:[%s1326 + $0x14] sm:$0xf]
  %v1333 = vld [vmem:[%s1326 + $0x18] sm:$0xf]
  %v1334 = vld [vmem:[%s1326 + $0x1c] sm:$0xf]
  %v1335 = vld [vmem:[%s1326 + $0x20] sm:$0xf]
  %v1336 = vld [vmem:[%s1326 + $0x24] sm:$0xf]
  %v1337 = vld [vmem:[%s1326 + $0x28] sm:$0xf]
  %v1338 = vld [vmem:[%s1326 + $0x2c] sm:$0xf]
  %v1339 = vld [vmem:[%s1326 + $0x30] sm:$0xf]
  %v1340 = vld [vmem:[%s1326 + $0x34] sm:$0xf]
  %v1341 = vld [vmem:[%s1326 + $0x38] sm:$0xf]
  %v1342 = vld [vmem:[%s1326 + $0x3c] sm:$0xf]
  %v1343 = vld [vmem:[%s1326 + $0x40] sm:$0xf]
  %v1344 = vld [vmem:[%s1326 + $0x44] sm:$0xf]
  %v1345 = vld [vmem:[%s1326 + $0x48] sm:$0xf]
  %v1346 = vld [vmem:[%s1326 + $0x4c] sm:$0xf]
  %v1347 = vld [vmem:[%s1326 + $0x50] sm:$0xf]
  %v1348 = vld [vmem:[%s1326 + $0x54] sm:$0xf]
  %v1349 = vld [vmem:[%s1326 + $0x58] sm:$0xf]
  %v1350 = vld [vmem:[%s1326 + $0x5c] sm:$0xf]
  %v1375 = vunpack.c.l.b16 %v1327
  %v1376 = vunpack.c.l.b16 %v1328
  %v1377 = vunpack.c.l.b16 %v1329
  %v1378 = vunpack.c.l.b16 %v1330
  %v1379 = vunpack.c.l.b16 %v1331
  %v1380 = vunpack.c.l.b16 %v1332
  %v1381 = vunpack.c.l.b16 %v1333
  %v1382 = vunpack.c.l.b16 %v1334
  %v1383 = vunpack.c.l.b16 %v1335
  %v1384 = vunpack.c.l.b16 %v1336
  %v1385 = vunpack.c.l.b16 %v1337
  %v1386 = vunpack.c.l.b16 %v1338
  %v1387 = vunpack.c.l.b16 %v1339
  %v1388 = vunpack.c.l.b16 %v1340
  %v1389 = vunpack.c.l.b16 %v1341
  %v1390 = vunpack.c.l.b16 %v1342
  %v1391 = vunpack.c.l.b16 %v1343
  %v1392 = vunpack.c.l.b16 %v1344
  %v1393 = vunpack.c.l.b16 %v1345
  %v1394 = vunpack.c.l.b16 %v1346
  %v1395 = vunpack.c.l.b16 %v1347
  %v1396 = vunpack.c.l.b16 %v1348
  %v1397 = vunpack.c.l.b16 %v1349
  %v1398 = vunpack.c.l.b16 %v1350
  %v1399 = vpack.c.b16 %v1376, %v1375
  %v1400 = vpack.c.b16 %v1378, %v1377
  %v1401 = vpack.c.b16 %v1380, %v1379
  %v1402 = vpack.c.b16 %v1382, %v1381
  %v1403 = vpack.c.b16 %v1384, %v1383
  %v1404 = vpack.c.b16 %v1386, %v1385
  %v1405 = vpack.c.b16 %v1388, %v1387
  %v1406 = vpack.c.b16 %v1390, %v1389
  %v1407 = vpack.c.b16 %v1392, %v1391
  %v1408 = vpack.c.b16 %v1394, %v1393
  %v1409 = vpack.c.b16 %v1396, %v1395
  %v1410 = vpack.c.b16 %v1398, %v1397
  %v1424 = vsel %vm322, %v1325, 0
  %1426 = vmatprep.subr.bf16.mxu0 0
  %1427 = vmatpush1.bf16.msra.mxu0 %v1399
  %1428 = vmatprep.subr.bf16.mxu0 0
  %1429 = vmatpush1.bf16.msra.mxu0 %v1400
  %1430 = vmatprep.subr.bf16.mxu0 0
  %1431 = vmatpush1.bf16.msra.mxu0 %v1401
  %1432 = vmatprep.subr.bf16.mxu0 0
  %1433 = vmatpush1.bf16.msra.mxu0 %v1402
  %1434 = vmatprep.subr.bf16.mxu0 0
  %1435 = vmatpush1.bf16.msra.mxu0 %v1403
  %1436 = vmatprep.subr.bf16.mxu0 0
  %1437 = vmatpush1.bf16.msra.mxu0 %v1404
  %1438 = vmatprep.subr.bf16.mxu0 0
  %1439 = vmatpush1.bf16.msra.mxu0 %v1405
  %1440 = vmatprep.subr.bf16.mxu0 0
  %1441 = vmatpush1.bf16.msra.mxu0 %v1406
  %1442 = vmatprep.subr.bf16.mxu0 0
  %1443 = vmatpush1.bf16.msra.mxu0 %v1407
  %1444 = vmatprep.subr.bf16.mxu0 0
  %1445 = vmatpush1.bf16.msra.mxu0 %v1408
  %1446 = vmatprep.subr.bf16.mxu0 0
  %1447 = vmatpush1.bf16.msra.mxu0 %v1409
  %1448 = vmatprep.subr.bf16.mxu0 0
  %1449 = vmatpush1.bf16.msra.mxu0 %v1410
  %1450 = vmatprep.subr.bf16.mxu0 0
  %1451 = vmatpush1.bf16.msra.mxu0 0
  %1452 = vmatprep.subr.bf16.mxu0 0
  %1453 = vmatpush1.bf16.msra.mxu0 0
  %1454 = vmatprep.subr.bf16.mxu0 0
  %1455 = vmatpush1.bf16.msra.mxu0 0
  %1456 = vmatprep.subr.bf16.mxu0 0
  %1457 = vmatpush1.bf16.msra.mxu0 0
  %1458 = vmatprep.mubr.bf16.mxu0 %v1424
  %1459 = vmatmul.mubr.bf16.gmra.mrb[0].mxu0 %v1324
  %v1460 = vpop.f32.mrb[0].mxu0
  %v1461 = vadd.f32 0.0, %v1460
  %v1462 = vpop.f32.mrb[0].mxu0
  %v1463 = vpop.f32.mrb[0].mxu0
  %v1464 = vadd.f32 0.0, %v1463
  %v1465 = vpop.f32.mrb[0].mxu0
  %1466 = vdwg.mxu0
  %v1467 = vadd.f32 %v1247, %v1461
  %v1468 = vadd.f32 %v1248, %v1464
  %v1469 = vld [vmem:[%s0 + $0xc] sm:$0xff]
  %v1470 = vld [vmem:[%s0 + $0x14] sm:$0xf]
  %v1471 = vld [vmem:[%s0 + $0x28] sm:$0xff]
  %v1472 = vld [vmem:[%s0 + $0x30] sm:$0xf]
  %v1477 = vunpack.c.l.b16 %v1469
  %v1478 = vunpack.c.h.b16 %v1469
  %v1479 = vunpack.c.l.b16 %v1470
  %v1480 = vunpack.c.l.b16 %v1471
  %v1481 = vunpack.c.h.b16 %v1471
  %v1482 = vunpack.c.l.b16 %v1472
  %v1483 = vpack.c.b16 %v1480, %v1477
  %v1484 = vpack.c.b16 %v1481, %v1478
  %v1485 = vpack.c.b16 %v1482, %v1479
  %1486 = vrot.lane.b32.xlu0 %v1483, 8
  %v1487 = vpop.permute.xlu0 %1486
  %1488 = vrot.lane.b32.xlu0 %v1484, 8
  %v1489 = vpop.permute.xlu0 %1488
  %1490 = vrot.lane.b32.xlu0 %v1485, 8
  %v1491 = vpop.permute.xlu0 %1490
  %vm1492 = vcmask 64512
  %v1493 = vsel %vm1492, %v1487, %v1489
  %v1494 = vsel %vm1492, %v1489, %v1491
  %v1497 = vsel %vm158, %v1494, 0
  %1499 = vmatprep.subr.bf16.mxu0 %v125
  %1500 = vmatpush1.bf16.msra.mxu0 %v124
  %1501 = vmatprep.subr.bf16.mxu0 %v127
  %1502 = vmatpush1.bf16.msra.mxu0 %v126
  %1503 = vmatprep.subr.bf16.mxu0 %v129
  %1504 = vmatpush1.bf16.msra.mxu0 %v128
  %1505 = vmatprep.subr.bf16.mxu0 %v131
  %1506 = vmatpush1.bf16.msra.mxu0 %v130
  %1507 = vmatprep.subr.bf16.mxu0 %v133
  %1508 = vmatpush1.bf16.msra.mxu0 %v132
  %1509 = vmatprep.subr.bf16.mxu0 %v135
  %1510 = vmatpush1.bf16.msra.mxu0 %v134
  %1511 = vmatprep.subr.bf16.mxu0 %v137
  %1512 = vmatpush1.bf16.msra.mxu0 %v136
  %1513 = vmatprep.subr.bf16.mxu0 %v139
  %1514 = vmatpush1.bf16.msra.mxu0 %v138
  %1515 = vmatprep.subr.bf16.mxu0 %v167
  %1516 = vmatpush1.bf16.msra.mxu0 %v164
  %1517 = vmatprep.subr.bf16.mxu0 0
  %1518 = vmatpush1.bf16.msra.mxu0 0
  %1519 = vmatprep.subr.bf16.mxu0 0
  %1520 = vmatpush1.bf16.msra.mxu0 0
  %1521 = vmatprep.subr.bf16.mxu0 0
  %1522 = vmatpush1.bf16.msra.mxu0 0
  %1523 = vmatprep.subr.bf16.mxu0 0
  %1524 = vmatpush1.bf16.msra.mxu0 0
  %1525 = vmatprep.subr.bf16.mxu0 0
  %1526 = vmatpush1.bf16.msra.mxu0 0
  %1527 = vmatprep.subr.bf16.mxu0 0
  %1528 = vmatpush1.bf16.msra.mxu0 0
  %1529 = vmatprep.subr.bf16.mxu0 0
  %1530 = vmatpush1.bf16.msra.mxu0 0
  %1531 = vmatprep.mubr.bf16.mxu0 %v1497
  %1532 = vmatmul.mubr.bf16.gmra.mrb[0].mxu0 %v1493
  %v1533 = vpop.f32.mrb[0].mxu0
  %v1534 = vadd.f32 %v54, %v1533
  %v1535 = vpop.f32.mrb[0].mxu0
  %v1536 = vadd.f32 %v58, %v1535
  %v1537 = vpop.f32.mrb[0].mxu0
  %v1538 = vadd.f32 %v54, %v1537
  %v1539 = vpop.f32.mrb[0].mxu0
  %v1540 = vadd.f32 %v58, %v1539
  %1541 = vdwg.mxu0
  %vm1542 = vcmp.ge.f32.partialorder %v1534, 0.0
  %vm1543 = vcmp.ge.f32.partialorder %v1536, 0.0
  %vm1544 = vcmp.ge.f32.partialorder %v1538, 0.0
  %vm1545 = vcmp.ge.f32.partialorder %v1540, 0.0
  %v1546 = vmul.f32 %v1534, 0.01
  %v1547 = vmul.f32 %v1536, 0.01
  %v1548 = vmul.f32 %v1538, 0.01
  %v1549 = vmul.f32 %v1540, 0.01
  %v1550 = vsel %vm1542, %v1534, %v1546
  %v1551 = vsel %vm1543, %v1536, %v1547
  %v1552 = vsel %vm1544, %v1538, %v1548
  %v1553 = vsel %vm1545, %v1540, %v1549
  %v1554 = vpack.c.bf16 %v1552, %v1550
  %v1555 = vpack.c.bf16 %v1553, %v1551
  %s1556 = scalar_lea.vmem %s3, 576
  %v1557 = vld [vmem:[%s1556] sm:$0xf]
  %v1558 = vld [vmem:[%s1556 + $0x4] sm:$0xf]
  %v1559 = vld [vmem:[%s1556 + $0x8] sm:$0xf]
  %v1560 = vld [vmem:[%s1556 + $0xc] sm:$0xf]
  %v1561 = vld [vmem:[%s1556 + $0x10] sm:$0xf]
  %v1562 = vld [vmem:[%s1556 + $0x14] sm:$0xf]
  %v1563 = vld [vmem:[%s1556 + $0x18] sm:$0xf]
  %v1564 = vld [vmem:[%s1556 + $0x1c] sm:$0xf]
  %v1565 = vld [vmem:[%s1556 + $0x20] sm:$0xf]
  %v1566 = vld [vmem:[%s1556 + $0x24] sm:$0xf]
  %v1567 = vld [vmem:[%s1556 + $0x28] sm:$0xf]
  %v1568 = vld [vmem:[%s1556 + $0x2c] sm:$0xf]
  %v1569 = vld [vmem:[%s1556 + $0x30] sm:$0xf]
  %v1570 = vld [vmem:[%s1556 + $0x34] sm:$0xf]
  %v1571 = vld [vmem:[%s1556 + $0x38] sm:$0xf]
  %v1572 = vld [vmem:[%s1556 + $0x3c] sm:$0xf]
  %v1573 = vld [vmem:[%s1556 + $0x40] sm:$0xf]
  %v1574 = vld [vmem:[%s1556 + $0x44] sm:$0xf]
  %v1575 = vld [vmem:[%s1556 + $0x48] sm:$0xf]
  %v1576 = vld [vmem:[%s1556 + $0x4c] sm:$0xf]
  %v1577 = vld [vmem:[%s1556 + $0x50] sm:$0xf]
  %v1578 = vld [vmem:[%s1556 + $0x54] sm:$0xf]
  %v1579 = vld [vmem:[%s1556 + $0x58] sm:$0xf]
  %v1580 = vld [vmem:[%s1556 + $0x5c] sm:$0xf]
  %v1605 = vunpack.c.l.b16 %v1557
  %v1606 = vunpack.c.l.b16 %v1558
  %v1607 = vunpack.c.l.b16 %v1559
  %v1608 = vunpack.c.l.b16 %v1560
  %v1609 = vunpack.c.l.b16 %v1561
  %v1610 = vunpack.c.l.b16 %v1562
  %v1611 = vunpack.c.l.b16 %v1563
  %v1612 = vunpack.c.l.b16 %v1564
  %v1613 = vunpack.c.l.b16 %v1565
  %v1614 = vunpack.c.l.b16 %v1566
  %v1615 = vunpack.c.l.b16 %v1567
  %v1616 = vunpack.c.l.b16 %v1568
  %v1617 = vunpack.c.l.b16 %v1569
  %v1618 = vunpack.c.l.b16 %v1570
  %v1619 = vunpack.c.l.b16 %v1571
  %v1620 = vunpack.c.l.b16 %v1572
  %v1621 = vunpack.c.l.b16 %v1573
  %v1622 = vunpack.c.l.b16 %v1574
  %v1623 = vunpack.c.l.b16 %v1575
  %v1624 = vunpack.c.l.b16 %v1576
  %v1625 = vunpack.c.l.b16 %v1577
  %v1626 = vunpack.c.l.b16 %v1578
  %v1627 = vunpack.c.l.b16 %v1579
  %v1628 = vunpack.c.l.b16 %v1580
  %v1629 = vpack.c.b16 %v1606, %v1605
  %v1630 = vpack.c.b16 %v1608, %v1607
  %v1631 = vpack.c.b16 %v1610, %v1609
  %v1632 = vpack.c.b16 %v1612, %v1611
  %v1633 = vpack.c.b16 %v1614, %v1613
  %v1634 = vpack.c.b16 %v1616, %v1615
  %v1635 = vpack.c.b16 %v1618, %v1617
  %v1636 = vpack.c.b16 %v1620, %v1619
  %v1637 = vpack.c.b16 %v1622, %v1621
  %v1638 = vpack.c.b16 %v1624, %v1623
  %v1639 = vpack.c.b16 %v1626, %v1625
  %v1640 = vpack.c.b16 %v1628, %v1627
  %v1654 = vsel %vm322, %v1555, 0
  %1656 = vmatprep.subr.bf16.mxu0 0
  %1657 = vmatpush1.bf16.msra.mxu0 %v1629
  %1658 = vmatprep.subr.bf16.mxu0 0
  %1659 = vmatpush1.bf16.msra.mxu0 %v1630
  %1660 = vmatprep.subr.bf16.mxu0 0
  %1661 = vmatpush1.bf16.msra.mxu0 %v1631
  %1662 = vmatprep.subr.bf16.mxu0 0
  %1663 = vmatpush1.bf16.msra.mxu0 %v1632
  %1664 = vmatprep.subr.bf16.mxu0 0
  %1665 = vmatpush1.bf16.msra.mxu0 %v1633
  %1666 = vmatprep.subr.bf16.mxu0 0
  %1667 = vmatpush1.bf16.msra.mxu0 %v1634
  %1668 = vmatprep.subr.bf16.mxu0 0
  %1669 = vmatpush1.bf16.msra.mxu0 %v1635
  %1670 = vmatprep.subr.bf16.mxu0 0
  %1671 = vmatpush1.bf16.msra.mxu0 %v1636
  %1672 = vmatprep.subr.bf16.mxu0 0
  %1673 = vmatpush1.bf16.msra.mxu0 %v1637
  %1674 = vmatprep.subr.bf16.mxu0 0
  %1675 = vmatpush1.bf16.msra.mxu0 %v1638
  %1676 = vmatprep.subr.bf16.mxu0 0
  %1677 = vmatpush1.bf16.msra.mxu0 %v1639
  %1678 = vmatprep.subr.bf16.mxu0 0
  %1679 = vmatpush1.bf16.msra.mxu0 %v1640
  %1680 = vmatprep.subr.bf16.mxu0 0
  %1681 = vmatpush1.bf16.msra.mxu0 0
  %1682 = vmatprep.subr.bf16.mxu0 0
  %1683 = vmatpush1.bf16.msra.mxu0 0
  %1684 = vmatprep.subr.bf16.mxu0 0
  %1685 = vmatpush1.bf16.msra.mxu0 0
  %1686 = vmatprep.subr.bf16.mxu0 0
  %1687 = vmatpush1.bf16.msra.mxu0 0
  %1688 = vmatprep.mubr.bf16.mxu0 %v1654
  %1689 = vmatmul.mubr.bf16.gmra.mrb[0].mxu0 %v1554
  %v1690 = vpop.f32.mrb[0].mxu0
  %v1691 = vadd.f32 0.0, %v1690
  %v1692 = vpop.f32.mrb[0].mxu0
  %v1693 = vpop.f32.mrb[0].mxu0
  %v1694 = vadd.f32 0.0, %v1693
  %v1695 = vpop.f32.mrb[0].mxu0
  %1696 = vdwg.mxu0
  %v1697 = vadd.f32 %v1467, %v1691
  %v1698 = vadd.f32 %v1468, %v1694
  %v1699 = vld [vmem:[%s0 + $0x10] sm:$0xff]
  %v1700 = vld [vmem:[%s0 + $0x2c] sm:$0xff]
  %v1703 = vunpack.c.l.b16 %v1699
  %v1704 = vunpack.c.h.b16 %v1699
  %v1705 = vunpack.c.l.b16 %v1700
  %v1706 = vunpack.c.h.b16 %v1700
  %v1707 = vpack.c.b16 %v1705, %v1703
  %v1708 = vpack.c.b16 %v1706, %v1704
  %1709 = vrot.lane.b32.xlu0 %v1707, 52
  %v1710 = vpop.permute.xlu0 %1709
  %1711 = vrot.lane.b32.xlu0 %v1708, 52
  %v1712 = vpop.permute.xlu0 %1711
  %vm1713 = vcmask 424960
  %v1714 = vsel %vm1713, %v1710, %v1712
  %v1717 = vsel %vm158, %v1712, 0
  %1719 = vmatprep.subr.bf16.mxu0 %v125
  %1720 = vmatpush1.bf16.msra.mxu0 %v124
  %1721 = vmatprep.subr.bf16.mxu0 %v127
  %1722 = vmatpush1.bf16.msra.mxu0 %v126
  %1723 = vmatprep.subr.bf16.mxu0 %v129
  %1724 = vmatpush1.bf16.msra.mxu0 %v128
  %1725 = vmatprep.subr.bf16.mxu0 %v131
  %1726 = vmatpush1.bf16.msra.mxu0 %v130
  %1727 = vmatprep.subr.bf16.mxu0 %v133
  %1728 = vmatpush1.bf16.msra.mxu0 %v132
  %1729 = vmatprep.subr.bf16.mxu0 %v135
  %1730 = vmatpush1.bf16.msra.mxu0 %v134
  %1731 = vmatprep.subr.bf16.mxu0 %v137
  %1732 = vmatpush1.bf16.msra.mxu0 %v136
  %1733 = vmatprep.subr.bf16.mxu0 %v139
  %1734 = vmatpush1.bf16.msra.mxu0 %v138
  %1735 = vmatprep.subr.bf16.mxu0 %v167
  %1736 = vmatpush1.bf16.msra.mxu0 %v164
  %1737 = vmatprep.subr.bf16.mxu0 0
  %1738 = vmatpush1.bf16.msra.mxu0 0
  %1739 = vmatprep.subr.bf16.mxu0 0
  %1740 = vmatpush1.bf16.msra.mxu0 0
  %1741 = vmatprep.subr.bf16.mxu0 0
  %1742 = vmatpush1.bf16.msra.mxu0 0
  %1743 = vmatprep.subr.bf16.mxu0 0
  %1744 = vmatpush1.bf16.msra.mxu0 0
  %1745 = vmatprep.subr.bf16.mxu0 0
  %1746 = vmatpush1.bf16.msra.mxu0 0
  %1747 = vmatprep.subr.bf16.mxu0 0
  %1748 = vmatpush1.bf16.msra.mxu0 0
  %1749 = vmatprep.subr.bf16.mxu0 0
  %1750 = vmatpush1.bf16.msra.mxu0 0
  %1751 = vmatprep.mubr.bf16.mxu0 %v1717
  %1752 = vmatmul.mubr.bf16.gmra.mrb[0].mxu0 %v1714
  %v1753 = vpop.f32.mrb[0].mxu0
  %v1754 = vadd.f32 %v54, %v1753
  %v1755 = vpop.f32.mrb[0].mxu0
  %v1756 = vadd.f32 %v58, %v1755
  %v1757 = vpop.f32.mrb[0].mxu0
  %v1758 = vadd.f32 %v54, %v1757
  %v1759 = vpop.f32.mrb[0].mxu0
  %v1760 = vadd.f32 %v58, %v1759
  %1761 = vdwg.mxu0
  %vm1762 = vcmp.ge.f32.partialorder %v1754, 0.0
  %vm1763 = vcmp.ge.f32.partialorder %v1756, 0.0
  %vm1764 = vcmp.ge.f32.partialorder %v1758, 0.0
  %vm1765 = vcmp.ge.f32.partialorder %v1760, 0.0
  %v1766 = vmul.f32 %v1754, 0.01
  %v1767 = vmul.f32 %v1756, 0.01
  %v1768 = vmul.f32 %v1758, 0.01
  %v1769 = vmul.f32 %v1760, 0.01
  %v1770 = vsel %vm1762, %v1754, %v1766
  %v1771 = vsel %vm1763, %v1756, %v1767
  %v1772 = vsel %vm1764, %v1758, %v1768
  %v1773 = vsel %vm1765, %v1760, %v1769
  %v1774 = vpack.c.bf16 %v1772, %v1770
  %v1775 = vpack.c.bf16 %v1773, %v1771
  %s1776 = scalar_lea.vmem %s3, 672
  %v1777 = vld [vmem:[%s1776] sm:$0xf]
  %v1778 = vld [vmem:[%s1776 + $0x4] sm:$0xf]
  %v1779 = vld [vmem:[%s1776 + $0x8] sm:$0xf]
  %v1780 = vld [vmem:[%s1776 + $0xc] sm:$0xf]
  %v1781 = vld [vmem:[%s1776 + $0x10] sm:$0xf]
  %v1782 = vld [vmem:[%s1776 + $0x14] sm:$0xf]
  %v1783 = vld [vmem:[%s1776 + $0x18] sm:$0xf]
  %v1784 = vld [vmem:[%s1776 + $0x1c] sm:$0xf]
  %v1785 = vld [vmem:[%s1776 + $0x20] sm:$0xf]
  %v1786 = vld [vmem:[%s1776 + $0x24] sm:$0xf]
  %v1787 = vld [vmem:[%s1776 + $0x28] sm:$0xf]
  %v1788 = vld [vmem:[%s1776 + $0x2c] sm:$0xf]
  %v1789 = vld [vmem:[%s1776 + $0x30] sm:$0xf]
  %v1790 = vld [vmem:[%s1776 + $0x34] sm:$0xf]
  %v1791 = vld [vmem:[%s1776 + $0x38] sm:$0xf]
  %v1792 = vld [vmem:[%s1776 + $0x3c] sm:$0xf]
  %v1793 = vld [vmem:[%s1776 + $0x40] sm:$0xf]
  %v1794 = vld [vmem:[%s1776 + $0x44] sm:$0xf]
  %v1795 = vld [vmem:[%s1776 + $0x48] sm:$0xf]
  %v1796 = vld [vmem:[%s1776 + $0x4c] sm:$0xf]
  %v1797 = vld [vmem:[%s1776 + $0x50] sm:$0xf]
  %v1798 = vld [vmem:[%s1776 + $0x54] sm:$0xf]
  %v1799 = vld [vmem:[%s1776 + $0x58] sm:$0xf]
  %v1800 = vld [vmem:[%s1776 + $0x5c] sm:$0xf]
  %v1825 = vunpack.c.l.b16 %v1777
  %v1826 = vunpack.c.l.b16 %v1778
  %v1827 = vunpack.c.l.b16 %v1779
  %v1828 = vunpack.c.l.b16 %v1780
  %v1829 = vunpack.c.l.b16 %v1781
  %v1830 = vunpack.c.l.b16 %v1782
  %v1831 = vunpack.c.l.b16 %v1783
  %v1832 = vunpack.c.l.b16 %v1784
  %v1833 = vunpack.c.l.b16 %v1785
  %v1834 = vunpack.c.l.b16 %v1786
  %v1835 = vunpack.c.l.b16 %v1787
  %v1836 = vunpack.c.l.b16 %v1788
  %v1837 = vunpack.c.l.b16 %v1789
  %v1838 = vunpack.c.l.b16 %v1790
  %v1839 = vunpack.c.l.b16 %v1791
  %v1840 = vunpack.c.l.b16 %v1792
  %v1841 = vunpack.c.l.b16 %v1793
  %v1842 = vunpack.c.l.b16 %v1794
  %v1843 = vunpack.c.l.b16 %v1795
  %v1844 = vunpack.c.l.b16 %v1796
  %v1845 = vunpack.c.l.b16 %v1797
  %v1846 = vunpack.c.l.b16 %v1798
  %v1847 = vunpack.c.l.b16 %v1799
  %v1848 = vunpack.c.l.b16 %v1800
  %v1849 = vpack.c.b16 %v1826, %v1825
  %v1850 = vpack.c.b16 %v1828, %v1827
  %v1851 = vpack.c.b16 %v1830, %v1829
  %v1852 = vpack.c.b16 %v1832, %v1831
  %v1853 = vpack.c.b16 %v1834, %v1833
  %v1854 = vpack.c.b16 %v1836, %v1835
  %v1855 = vpack.c.b16 %v1838, %v1837
  %v1856 = vpack.c.b16 %v1840, %v1839
  %v1857 = vpack.c.b16 %v1842, %v1841
  %v1858 = vpack.c.b16 %v1844, %v1843
  %v1859 = vpack.c.b16 %v1846, %v1845
  %v1860 = vpack.c.b16 %v1848, %v1847
  %v1874 = vsel %vm322, %v1775, 0
  %1876 = vmatprep.subr.bf16.mxu0 0
  %1877 = vmatpush1.bf16.msra.mxu0 %v1849
  %1878 = vmatprep.subr.bf16.mxu0 0
  %1879 = vmatpush1.bf16.msra.mxu0 %v1850
  %1880 = vmatprep.subr.bf16.mxu0 0
  %1881 = vmatpush1.bf16.msra.mxu0 %v1851
  %1882 = vmatprep.subr.bf16.mxu0 0
  %1883 = vmatpush1.bf16.msra.mxu0 %v1852
  %1884 = vmatprep.subr.bf16.mxu0 0
  %1885 = vmatpush1.bf16.msra.mxu0 %v1853
  %1886 = vmatprep.subr.bf16.mxu0 0
  %1887 = vmatpush1.bf16.msra.mxu0 %v1854
  %1888 = vmatprep.subr.bf16.mxu0 0
  %1889 = vmatpush1.bf16.msra.mxu0 %v1855
  %1890 = vmatprep.subr.bf16.mxu0 0
  %1891 = vmatpush1.bf16.msra.mxu0 %v1856
  %1892 = vmatprep.subr.bf16.mxu0 0
  %1893 = vmatpush1.bf16.msra.mxu0 %v1857
  %1894 = vmatprep.subr.bf16.mxu0 0
  %1895 = vmatpush1.bf16.msra.mxu0 %v1858
  %1896 = vmatprep.subr.bf16.mxu0 0
  %1897 = vmatpush1.bf16.msra.mxu0 %v1859
  %1898 = vmatprep.subr.bf16.mxu0 0
  %1899 = vmatpush1.bf16.msra.mxu0 %v1860
  %1900 = vmatprep.subr.bf16.mxu0 0
  %1901 = vmatpush1.bf16.msra.mxu0 0
  %1902 = vmatprep.subr.bf16.mxu0 0
  %1903 = vmatpush1.bf16.msra.mxu0 0
  %1904 = vmatprep.subr.bf16.mxu0 0
  %1905 = vmatpush1.bf16.msra.mxu0 0
  %1906 = vmatprep.subr.bf16.mxu0 0
  %1907 = vmatpush1.bf16.msra.mxu0 0
  %1908 = vmatprep.mubr.bf16.mxu0 %v1874
  %1909 = vmatmul.mubr.bf16.gmra.mrb[0].mxu0 %v1774
  %v1910 = vpop.f32.mrb[0].mxu0
  %v1911 = vadd.f32 0.0, %v1910
  %v1912 = vpop.f32.mrb[0].mxu0
  %v1913 = vpop.f32.mrb[0].mxu0
  %v1914 = vadd.f32 0.0, %v1913
  %v1915 = vpop.f32.mrb[0].mxu0
  %1916 = vdwg.mxu0
  %v1917 = vadd.f32 %v1697, %v1911
  %v1918 = vadd.f32 %v1698, %v1914
  %vm1919 = vcmask 80896
  %1920 = vst.msk [vmem:[%s5] sm:$0xff] %vm1919, %v1917
  %1921 = vst.msk [vmem:[%s5 + $0x8] sm:$0xff] %vm1919, %v1918
  // Predicated region
  $region22: #{pr_cnn_forward.1} parent=0 // pred_check
    _
  $region23: #{pr_cnn_forward.1} parent=0 // pred_check_branch
    %1923 = sbr.rel (0) target = $region25
  $region24: #{pr_cnn_forward.1} parent=0 // pred_region
    _
  $region25: #{pr_cnn_forward.1} parent=0 // pred_fallthru
    _
  // Predicated region
  $region26: #{pr_cnn_forward.1} parent=0 // pred_check
    _
  $region27: #{pr_cnn_forward.1} parent=0 // pred_check_branch
    %1925 = sbr.rel (0) target = $region29
  $region28: #{pr_cnn_forward.1} parent=0 // pred_region
    _
  $region29: #{pr_cnn_forward.1} parent=0 // pred_fallthru
    _

</llo_original>
